<compile_context>
chip_gen: v5e
topology: v5e:2x2
jax: 0.10.0
libtpu: 0.0.40
codegen_flags: <defaults>
</compile_context>

<pallas_src>
import jax
import jax.numpy as jnp
from jax import lax
from jax.experimental import pallas as pl
from jax.experimental.pallas import tpu as pltpu

INPUT_SIZE = 20
HIDDEN = 64
NUM_CLASSES = 5


def _lstm_kernel(x2d_ref, wih1_ref, whh1_ref, b1_ref,
                 wih2_ref, whh2_ref, b2_ref,
                 wout_ref, bout_ref, out_ref, xw_ref):
    T = xw_ref.shape[0]
    B = xw_ref.shape[1]
    H = whh1_ref.shape[0]

    # Recurrent weights, loaded once (loop-invariant).
    whh1 = whh1_ref[...]   # (H, 4H)  column blocks [i, f, o, g]
    wih2 = wih2_ref[...]   # (H, 4H)
    whh2 = whh2_ref[...]   # (H, 4H)

    # ---- Hoisted layer-1 input projection: ONE matmul for all timesteps. ----
    # (T*B, I) @ (I, 4H) + b1  -> staged into VMEM scratch (T, B, 4H).
    xw_all = (jnp.dot(x2d_ref[...], wih1_ref[...],
                      preferred_element_type=jnp.float32)
              + b1_ref[...])                       # (T*B, 4H)
    for t in range(T):                             # static one-time fill of scratch
        xw_ref[t] = xw_all[t * B:(t + 1) * B, :]

    # ---- Hoisted bias broadcast for layer 2 (emitted once, not per iteration). ----
    b2b = jnp.broadcast_to(b2_ref[...], (B, 4 * H))

    def gate_act(pre, c_prev):
        # pre: (B, 4H) with column blocks ordered [i, f, o, g].
        # One sigmoid over the 3 sigmoid gates (via single tanh), one tanh for g.
        sig = jnp.tanh(0.5 * pre[:, :3 * H]) * 0.5 + 0.5
        g_g = jnp.tanh(pre[:, 3 * H:])
        i_g = sig[:, 0:H]
        f_g = sig[:, H:2 * H]
        o_g = sig[:, 2 * H:3 * H]
        c_new = f_g * c_prev + i_g * g_g
        h_new = o_g * jnp.tanh(c_new)
        return h_new, c_new

    def step(t, carry):
        h1, c1, h2, c2 = carry
        # Layer 1: input projection already precomputed -> only the recurrent matmul.
        pre1 = xw_ref[t] + jnp.dot(h1, whh1, preferred_element_type=jnp.float32)
        h1, c1 = gate_act(pre1, c1)
        # Layer 2: input comes from layer-1 output of the same timestep.
        pre2 = (jnp.dot(h1, wih2, preferred_element_type=jnp.float32)
                + jnp.dot(h2, whh2, preferred_element_type=jnp.float32)
                + b2b)
        h2, c2 = gate_act(pre2, c2)
        return (h1, c1, h2, c2)

    z = jnp.zeros((B, H), jnp.float32)
    # Fully unrolled (T static) so cross-step MXU/EUP work can be overlapped.
    _, _, h2, _ = lax.fori_loop(0, T, step, (z, z, z, z), unroll=True)

    # Final Linear on the last timestep of layer-2 hidden state.
    out_ref[...] = (jnp.dot(h2, wout_ref[...], preferred_element_type=jnp.float32)
                    + bout_ref[...])


# ----------------------------- parameters ---------------------------------------


def init_raw_params(key):
    """Deterministic params in native PyTorch LSTM/Linear layout (gate order i,f,g,o)."""
    ks = jax.random.split(key, 10)
    bound = 1.0 / (HIDDEN ** 0.5)

    def u(k, shape):
        return jax.random.uniform(k, shape, jnp.float32, -bound, bound)

    return dict(
        w_ih1=u(ks[0], (4 * HIDDEN, INPUT_SIZE)),
        w_hh1=u(ks[1], (4 * HIDDEN, HIDDEN)),
        b_ih1=u(ks[2], (4 * HIDDEN,)),
        b_hh1=u(ks[3], (4 * HIDDEN,)),
        w_ih2=u(ks[4], (4 * HIDDEN, HIDDEN)),
        w_hh2=u(ks[5], (4 * HIDDEN, HIDDEN)),
        b_ih2=u(ks[6], (4 * HIDDEN,)),
        b_hh2=u(ks[7], (4 * HIDDEN,)),
        w_out=u(ks[8], (NUM_CLASSES, HIDDEN)),
        b_out=u(ks[9], (NUM_CLASSES,)),
    )


def _reorder_ifgo_to_ifog(a):
    """Permute the 4H axis from PyTorch's [i, f, g, o] block order to [i, f, o, g]."""
    i, f, g, o = jnp.split(a, 4, axis=0)
    return jnp.concatenate([i, f, o, g], axis=0)


def pack_params(raw):
    """Kernel layout: gate blocks reordered to [i,f,o,g], weights pre-transposed,
    b_ih+b_hh fused."""
    H4 = 4 * HIDDEN
    r = _reorder_ifgo_to_ifog
    return dict(
        wih1_t=r(raw["w_ih1"]).T,                              # (I, 4H)
        whh1_t=r(raw["w_hh1"]).T,                              # (H, 4H)
        b1=r(raw["b_ih1"] + raw["b_hh1"]).reshape(1, H4),      # (1, 4H)
        wih2_t=r(raw["w_ih2"]).T,                              # (H, 4H)
        whh2_t=r(raw["w_hh2"]).T,                              # (H, 4H)
        b2=r(raw["b_ih2"] + raw["b_hh2"]).reshape(1, H4),      # (1, 4H)
        wout_t=raw["w_out"].T,                                 # (H, 5)
        bout=raw["b_out"].reshape(1, NUM_CLASSES),             # (1, 5)
    )


# ----------------------------- wrapper -------------------------------------------


def rnn_forward(x, params):
    """x: (B, T, I) float32 (batch_first, as in the PyTorch module). Returns (B, 5)."""
    B, T, I = x.shape
    assert I == INPUT_SIZE
    # Time-major, flattened to (T*B, I) so the layer-1 input projection in the kernel
    # is a single matmul; per-step slices are rows [t*B, (t+1)*B).
    x2d = jnp.transpose(x, (1, 0, 2)).reshape(T * B, I).astype(jnp.float32)

    operands = [
        x2d,
        params["wih1_t"], params["whh1_t"], params["b1"],
        params["wih2_t"], params["whh2_t"], params["b2"],
        params["wout_t"], params["bout"],
    ]

    # Everything is tiny (<0.3 MB); map each operand's full shape into VMEM, grid=(1,).
    in_specs = [
        pl.BlockSpec(a.shape, lambda i, n=a.ndim: (0,) * n) for a in operands
    ]
    out_spec = pl.BlockSpec((B, NUM_CLASSES), lambda i: (0, 0))

    out = pl.pallas_call(
        _lstm_kernel,
        out_shape=jax.ShapeDtypeStruct((B, NUM_CLASSES), jnp.float32),
        grid=(1,),
        in_specs=in_specs,
        out_specs=out_spec,
        scratch_shapes=[pltpu.VMEM((T, B, 4 * HIDDEN), jnp.float32)],
        compiler_params=pltpu.CompilerParams(
            dimension_semantics=("arbitrary",)),
    )(*operands)
    return out


# ----------------------------- pure-JAX reference --------------------------------


def _reference_forward(x, raw):
    """Straight transcription of the PyTorch module (gate order i, f, g, o)."""
    B, T, _ = x.shape

    def cell(x_t, h, c, w_ih, w_hh, b_ih, b_hh):
        g = x_t @ w_ih.T + b_ih + h @ w_hh.T + b_hh
        i = jax.nn.sigmoid(g[:, 0 * HIDDEN:1 * HIDDEN])
        f = jax.nn.sigmoid(g[:, 1 * HIDDEN:2 * HIDDEN])
        gg = jnp.tanh(g[:, 2 * HIDDEN:3 * HIDDEN])
        o = jax.nn.sigmoid(g[:, 3 * HIDDEN:4 * HIDDEN])
        c = f * c + i * gg
        h = o * jnp.tanh(c)
        return h, c

    h1 = c1 = h2 = c2 = jnp.zeros((B, HIDDEN), jnp.float32)
    for t in range(T):
        h1, c1 = cell(x[:, t], h1, c1, raw["w_ih1"], raw["w_hh1"],
                      raw["b_ih1"], raw["b_hh1"])
        h2, c2 = cell(h1, h2, c2, raw["w_ih2"], raw["w_hh2"],
                      raw["b_ih2"], raw["b_hh2"])
    return h2 @ raw["w_out"].T + raw["b_out"]


if __name__ == "__main__":
    key = jax.random.PRNGKey(0)
    k_param, k_x = jax.random.split(key)

    raw = init_raw_params(k_param)
    params = pack_params(raw)

    B, T = 2, 8   # small batch / sequence length; input feature size fixed at 20
    x = jax.random.normal(k_x, (B, T, INPUT_SIZE), jnp.float32)

    out = rnn_forward(x, params)
    out = jax.block_until_ready(out)
    assert out.shape == (B, NUM_CLASSES)

    ref = _reference_forward(x, raw)
    assert jnp.allclose(out, ref, atol=2e-3, rtol=2e-3), float(
        jnp.max(jnp.abs(out - ref)))
    print("KERNEL_OK")
</pallas_src>

<mosaic_0001>
module attributes {stable_mosaic.version = 11 : i64} {
  func.func @_lstm_kernel(%arg0: i32, %arg1: memref<16x20xf32, #tpu.memory_space<vmem>>, %arg2: memref<20x256xf32, #tpu.memory_space<vmem>>, %arg3: memref<64x256xf32, #tpu.memory_space<vmem>>, %arg4: memref<1x256xf32, #tpu.memory_space<vmem>>, %arg5: memref<64x256xf32, #tpu.memory_space<vmem>>, %arg6: memref<64x256xf32, #tpu.memory_space<vmem>>, %arg7: memref<1x256xf32, #tpu.memory_space<vmem>>, %arg8: memref<64x5xf32, #tpu.memory_space<vmem>>, %arg9: memref<1x5xf32, #tpu.memory_space<vmem>>, %arg10: memref<2x5xf32, #tpu.memory_space<vmem>>, %arg11: memref<8x2x256xf32, #tpu.memory_space<vmem>>) attributes {dimension_semantics = [#tpu.dimension_semantics<arbitrary>], iteration_bounds = array<i64: 1>, scalar_prefetch = 0 : i64, scratch_operands = 1 : i64, tpu.core_type = #tpu.core_type<tc>, window_params = [{pipeline_mode = #tpu.pipeline_mode<synchronous>, transform_indices = @transform_0, window_bounds = array<i64: 16, 20>}, {pipeline_mode = #tpu.pipeline_mode<synchronous>, transform_indices = @transform_1, window_bounds = array<i64: 20, 256>}, {pipeline_mode = #tpu.pipeline_mode<synchronous>, transform_indices = @transform_2, window_bounds = array<i64: 64, 256>}, {pipeline_mode = #tpu.pipeline_mode<synchronous>, transform_indices = @transform_3, window_bounds = array<i64: 1, 256>}, {pipeline_mode = #tpu.pipeline_mode<synchronous>, transform_indices = @transform_4, window_bounds = array<i64: 64, 256>}, {pipeline_mode = #tpu.pipeline_mode<synchronous>, transform_indices = @transform_5, window_bounds = array<i64: 64, 256>}, {pipeline_mode = #tpu.pipeline_mode<synchronous>, transform_indices = @transform_6, window_bounds = array<i64: 1, 256>}, {pipeline_mode = #tpu.pipeline_mode<synchronous>, transform_indices = @transform_7, window_bounds = array<i64: 64, 5>}, {pipeline_mode = #tpu.pipeline_mode<synchronous>, transform_indices = @transform_8, window_bounds = array<i64: 1, 5>}, {pipeline_mode = #tpu.pipeline_mode<synchronous>, transform_indices = @transform_9, window_bounds = array<i64: 2, 5>}]} {
    %c0 = arith.constant 0 : index
    %c0_0 = arith.constant 0 : index
    %0 = vector.load %arg3[%c0, %c0_0] : memref<64x256xf32, #tpu.memory_space<vmem>>, vector<64x256xf32>
    %c0_1 = arith.constant 0 : index
    %c0_2 = arith.constant 0 : index
    %1 = vector.load %arg5[%c0_1, %c0_2] : memref<64x256xf32, #tpu.memory_space<vmem>>, vector<64x256xf32>
    %c0_3 = arith.constant 0 : index
    %c0_4 = arith.constant 0 : index
    %2 = vector.load %arg6[%c0_3, %c0_4] : memref<64x256xf32, #tpu.memory_space<vmem>>, vector<64x256xf32>
    %c0_5 = arith.constant 0 : index
    %c0_6 = arith.constant 0 : index
    %3 = vector.load %arg1[%c0_5, %c0_6] : memref<16x20xf32, #tpu.memory_space<vmem>>, vector<16x20xf32>
    %c0_7 = arith.constant 0 : index
    %c0_8 = arith.constant 0 : index
    %4 = vector.load %arg2[%c0_7, %c0_8] : memref<20x256xf32, #tpu.memory_space<vmem>>, vector<20x256xf32>
    %cst = arith.constant dense<0.000000e+00> : vector<16x256xf32>
    %5 = tpu.matmul %3, %4, %cst {dimension_numbers = #tpu.dot_dimension_numbers<[1], [0], [0], [1], [0, 0, 1, 1], [], []>} : vector<16x20xf32>, vector<20x256xf32>, vector<16x256xf32> -> vector<16x256xf32>
    %c0_9 = arith.constant 0 : index
    %c0_10 = arith.constant 0 : index
    %6 = vector.load %arg4[%c0_9, %c0_10] : memref<1x256xf32, #tpu.memory_space<vmem>>, vector<1x256xf32>
    %7 = vector.broadcast %6 : vector<1x256xf32> to vector<16x256xf32>
    %8 = arith.addf %5, %7 : vector<16x256xf32>
    %9 = vector.extract_strided_slice %8 {offsets = [0, 0], sizes = [2, 256], strides = [1, 1]} : vector<16x256xf32> to vector<2x256xf32>
    %c0_11 = arith.constant 0 : index
    %c0_12 = arith.constant 0 : index
    %c0_13 = arith.constant 0 : index
    %10 = vector.load %arg11[%c0_11, %c0_12, %c0_13] : memref<8x2x256xf32, #tpu.memory_space<vmem>>, vector<1x2x256xf32>
    %11 = vector.shape_cast %10 : vector<1x2x256xf32> to vector<2x256xf32>
    %12 = vector.shape_cast %9 : vector<2x256xf32> to vector<1x2x256xf32>
    tpu.vector_store %arg11[%c0_11, %c0_12, %c0_13], %12 {strides = array<i32>} : memref<8x2x256xf32, #tpu.memory_space<vmem>>, vector<1x2x256xf32>,
    %13 = vector.extract_strided_slice %8 {offsets = [2, 0], sizes = [2, 256], strides = [1, 1]} : vector<16x256xf32> to vector<2x256xf32>
    %c1 = arith.constant 1 : index
    %c0_14 = arith.constant 0 : index
    %c0_15 = arith.constant 0 : index
    %14 = vector.load %arg11[%c1, %c0_14, %c0_15] : memref<8x2x256xf32, #tpu.memory_space<vmem>>, vector<1x2x256xf32>
    %15 = vector.shape_cast %14 : vector<1x2x256xf32> to vector<2x256xf32>
    %16 = vector.shape_cast %13 : vector<2x256xf32> to vector<1x2x256xf32>
    tpu.vector_store %arg11[%c1, %c0_14, %c0_15], %16 {strides = array<i32>} : memref<8x2x256xf32, #tpu.memory_space<vmem>>, vector<1x2x256xf32>,
    %17 = vector.extract_strided_slice %8 {offsets = [4, 0], sizes = [2, 256], strides = [1, 1]} : vector<16x256xf32> to vector<2x256xf32>
    %c2 = arith.constant 2 : index
    %c0_16 = arith.constant 0 : index
    %c0_17 = arith.constant 0 : index
    %18 = vector.load %arg11[%c2, %c0_16, %c0_17] : memref<8x2x256xf32, #tpu.memory_space<vmem>>, vector<1x2x256xf32>
    %19 = vector.shape_cast %18 : vector<1x2x256xf32> to vector<2x256xf32>
    %20 = vector.shape_cast %17 : vector<2x256xf32> to vector<1x2x256xf32>
    tpu.vector_store %arg11[%c2, %c0_16, %c0_17], %20 {strides = array<i32>} : memref<8x2x256xf32, #tpu.memory_space<vmem>>, vector<1x2x256xf32>,
    %21 = vector.extract_strided_slice %8 {offsets = [6, 0], sizes = [2, 256], strides = [1, 1]} : vector<16x256xf32> to vector<2x256xf32>
    %c3 = arith.constant 3 : index
    %c0_18 = arith.constant 0 : index
    %c0_19 = arith.constant 0 : index
    %22 = vector.load %arg11[%c3, %c0_18, %c0_19] : memref<8x2x256xf32, #tpu.memory_space<vmem>>, vector<1x2x256xf32>
    %23 = vector.shape_cast %22 : vector<1x2x256xf32> to vector<2x256xf32>
    %24 = vector.shape_cast %21 : vector<2x256xf32> to vector<1x2x256xf32>
    tpu.vector_store %arg11[%c3, %c0_18, %c0_19], %24 {strides = array<i32>} : memref<8x2x256xf32, #tpu.memory_space<vmem>>, vector<1x2x256xf32>,
    %25 = vector.extract_strided_slice %8 {offsets = [8, 0], sizes = [2, 256], strides = [1, 1]} : vector<16x256xf32> to vector<2x256xf32>
    %c4 = arith.constant 4 : index
    %c0_20 = arith.constant 0 : index
    %c0_21 = arith.constant 0 : index
    %26 = vector.load %arg11[%c4, %c0_20, %c0_21] : memref<8x2x256xf32, #tpu.memory_space<vmem>>, vector<1x2x256xf32>
    %27 = vector.shape_cast %26 : vector<1x2x256xf32> to vector<2x256xf32>
    %28 = vector.shape_cast %25 : vector<2x256xf32> to vector<1x2x256xf32>
    tpu.vector_store %arg11[%c4, %c0_20, %c0_21], %28 {strides = array<i32>} : memref<8x2x256xf32, #tpu.memory_space<vmem>>, vector<1x2x256xf32>,
    %29 = vector.extract_strided_slice %8 {offsets = [10, 0], sizes = [2, 256], strides = [1, 1]} : vector<16x256xf32> to vector<2x256xf32>
    %c5 = arith.constant 5 : index
    %c0_22 = arith.constant 0 : index
    %c0_23 = arith.constant 0 : index
    %30 = vector.load %arg11[%c5, %c0_22, %c0_23] : memref<8x2x256xf32, #tpu.memory_space<vmem>>, vector<1x2x256xf32>
    %31 = vector.shape_cast %30 : vector<1x2x256xf32> to vector<2x256xf32>
    %32 = vector.shape_cast %29 : vector<2x256xf32> to vector<1x2x256xf32>
    tpu.vector_store %arg11[%c5, %c0_22, %c0_23], %32 {strides = array<i32>} : memref<8x2x256xf32, #tpu.memory_space<vmem>>, vector<1x2x256xf32>,
    %33 = vector.extract_strided_slice %8 {offsets = [12, 0], sizes = [2, 256], strides = [1, 1]} : vector<16x256xf32> to vector<2x256xf32>
    %c6 = arith.constant 6 : index
    %c0_24 = arith.constant 0 : index
    %c0_25 = arith.constant 0 : index
    %34 = vector.load %arg11[%c6, %c0_24, %c0_25] : memref<8x2x256xf32, #tpu.memory_space<vmem>>, vector<1x2x256xf32>
    %35 = vector.shape_cast %34 : vector<1x2x256xf32> to vector<2x256xf32>
    %36 = vector.shape_cast %33 : vector<2x256xf32> to vector<1x2x256xf32>
    tpu.vector_store %arg11[%c6, %c0_24, %c0_25], %36 {strides = array<i32>} : memref<8x2x256xf32, #tpu.memory_space<vmem>>, vector<1x2x256xf32>,
    %37 = vector.extract_strided_slice %8 {offsets = [14, 0], sizes = [2, 256], strides = [1, 1]} : vector<16x256xf32> to vector<2x256xf32>
    %c7 = arith.constant 7 : index
    %c0_26 = arith.constant 0 : index
    %c0_27 = arith.constant 0 : index
    %38 = vector.load %arg11[%c7, %c0_26, %c0_27] : memref<8x2x256xf32, #tpu.memory_space<vmem>>, vector<1x2x256xf32>
    %39 = vector.shape_cast %38 : vector<1x2x256xf32> to vector<2x256xf32>
    %40 = vector.shape_cast %37 : vector<2x256xf32> to vector<1x2x256xf32>
    tpu.vector_store %arg11[%c7, %c0_26, %c0_27], %40 {strides = array<i32>} : memref<8x2x256xf32, #tpu.memory_space<vmem>>, vector<1x2x256xf32>,
    %c0_28 = arith.constant 0 : index
    %c0_29 = arith.constant 0 : index
    %41 = vector.load %arg7[%c0_28, %c0_29] : memref<1x256xf32, #tpu.memory_space<vmem>>, vector<1x256xf32>
    %42 = vector.shape_cast %41 : vector<1x256xf32> to vector<1x256xf32>
    %43 = vector.broadcast %42 : vector<1x256xf32> to vector<2x256xf32>
    %cst_30 = arith.constant 0.000000e+00 : f32
    %44 = vector.broadcast %cst_30 : f32 to vector<2x64xf32>
    %c0_i32 = arith.constant 0 : i32
    %45 = arith.index_cast %c0_i32 : i32 to index
    %c0_31 = arith.constant 0 : index
    %c0_32 = arith.constant 0 : index
    %46 = vector.load %arg11[%45, %c0_31, %c0_32] : memref<8x2x256xf32, #tpu.memory_space<vmem>>, vector<1x2x256xf32>
    %47 = vector.shape_cast %46 : vector<1x2x256xf32> to vector<2x256xf32>
    %cst_33 = arith.constant dense<0.000000e+00> : vector<2x256xf32>
    %48 = tpu.matmul %44, %0, %cst_33 {dimension_numbers = #tpu.dot_dimension_numbers<[1], [0], [0], [1], [0, 0, 1, 1], [], []>} : vector<2x64xf32>, vector<64x256xf32>, vector<2x256xf32> -> vector<2x256xf32>
    %49 = arith.addf %47, %48 : vector<2x256xf32>
    %50 = vector.extract_strided_slice %49 {offsets = [0, 0], sizes = [2, 192], strides = [1, 1]} : vector<2x256xf32> to vector<2x192xf32>
    %cst_34 = arith.constant 5.000000e-01 : f32
    %51 = vector.broadcast %cst_34 : f32 to vector<2x192xf32>
    %52 = arith.mulf %51, %50 : vector<2x192xf32>
    %53 = math.tanh %52 : vector<2x192xf32>
    %cst_35 = arith.constant 5.000000e-01 : f32
    %54 = vector.broadcast %cst_35 : f32 to vector<2x192xf32>
    %55 = arith.mulf %53, %54 : vector<2x192xf32>
    %cst_36 = arith.constant 5.000000e-01 : f32
    %56 = vector.broadcast %cst_36 : f32 to vector<2x192xf32>
    %57 = arith.addf %55, %56 : vector<2x192xf32>
    %58 = vector.extract_strided_slice %49 {offsets = [0, 192], sizes = [2, 64], strides = [1, 1]} : vector<2x256xf32> to vector<2x64xf32>
    %59 = math.tanh %58 : vector<2x64xf32>
    %60 = vector.extract_strided_slice %57 {offsets = [0, 0], sizes = [2, 64], strides = [1, 1]} : vector<2x192xf32> to vector<2x64xf32>
    %61 = vector.extract_strided_slice %57 {offsets = [0, 64], sizes = [2, 64], strides = [1, 1]} : vector<2x192xf32> to vector<2x64xf32>
    %62 = vector.extract_strided_slice %57 {offsets = [0, 128], sizes = [2, 64], strides = [1, 1]} : vector<2x192xf32> to vector<2x64xf32>
    %63 = arith.mulf %61, %44 : vector<2x64xf32>
    %64 = arith.mulf %60, %59 : vector<2x64xf32>
    %65 = arith.addf %63, %64 : vector<2x64xf32>
    %66 = math.tanh %65 : vector<2x64xf32>
    %67 = arith.mulf %62, %66 : vector<2x64xf32>
    %cst_37 = arith.constant dense<0.000000e+00> : vector<2x256xf32>
    %68 = tpu.matmul %67, %1, %cst_37 {dimension_numbers = #tpu.dot_dimension_numbers<[1], [0], [0], [1], [0, 0, 1, 1], [], []>} : vector<2x64xf32>, vector<64x256xf32>, vector<2x256xf32> -> vector<2x256xf32>
    %cst_38 = arith.constant dense<0.000000e+00> : vector<2x256xf32>
    %69 = tpu.matmul %44, %2, %cst_38 {dimension_numbers = #tpu.dot_dimension_numbers<[1], [0], [0], [1], [0, 0, 1, 1], [], []>} : vector<2x64xf32>, vector<64x256xf32>, vector<2x256xf32> -> vector<2x256xf32>
    %70 = arith.addf %68, %69 : vector<2x256xf32>
    %71 = arith.addf %70, %43 : vector<2x256xf32>
    %72 = vector.extract_strided_slice %71 {offsets = [0, 0], sizes = [2, 192], strides = [1, 1]} : vector<2x256xf32> to vector<2x192xf32>
    %cst_39 = arith.constant 5.000000e-01 : f32
    %73 = vector.broadcast %cst_39 : f32 to vector<2x192xf32>
    %74 = arith.mulf %73, %72 : vector<2x192xf32>
    %75 = math.tanh %74 : vector<2x192xf32>
    %cst_40 = arith.constant 5.000000e-01 : f32
    %76 = vector.broadcast %cst_40 : f32 to vector<2x192xf32>
    %77 = arith.mulf %75, %76 : vector<2x192xf32>
    %cst_41 = arith.constant 5.000000e-01 : f32
    %78 = vector.broadcast %cst_41 : f32 to vector<2x192xf32>
    %79 = arith.addf %77, %78 : vector<2x192xf32>
    %80 = vector.extract_strided_slice %71 {offsets = [0, 192], sizes = [2, 64], strides = [1, 1]} : vector<2x256xf32> to vector<2x64xf32>
    %81 = math.tanh %80 : vector<2x64xf32>
    %82 = vector.extract_strided_slice %79 {offsets = [0, 0], sizes = [2, 64], strides = [1, 1]} : vector<2x192xf32> to vector<2x64xf32>
    %83 = vector.extract_strided_slice %79 {offsets = [0, 64], sizes = [2, 64], strides = [1, 1]} : vector<2x192xf32> to vector<2x64xf32>
    %84 = vector.extract_strided_slice %79 {offsets = [0, 128], sizes = [2, 64], strides = [1, 1]} : vector<2x192xf32> to vector<2x64xf32>
    %85 = arith.mulf %83, %44 : vector<2x64xf32>
    %86 = arith.mulf %82, %81 : vector<2x64xf32>
    %87 = arith.addf %85, %86 : vector<2x64xf32>
    %88 = math.tanh %87 : vector<2x64xf32>
    %89 = arith.mulf %84, %88 : vector<2x64xf32>
    %c1_i32 = arith.constant 1 : i32
    %90 = arith.index_cast %c1_i32 : i32 to index
    %c0_42 = arith.constant 0 : index
    %c0_43 = arith.constant 0 : index
    %91 = vector.load %arg11[%90, %c0_42, %c0_43] : memref<8x2x256xf32, #tpu.memory_space<vmem>>, vector<1x2x256xf32>
    %92 = vector.shape_cast %91 : vector<1x2x256xf32> to vector<2x256xf32>
    %cst_44 = arith.constant dense<0.000000e+00> : vector<2x256xf32>
    %93 = tpu.matmul %67, %0, %cst_44 {dimension_numbers = #tpu.dot_dimension_numbers<[1], [0], [0], [1], [0, 0, 1, 1], [], []>} : vector<2x64xf32>, vector<64x256xf32>, vector<2x256xf32> -> vector<2x256xf32>
    %94 = arith.addf %92, %93 : vector<2x256xf32>
    %95 = vector.extract_strided_slice %94 {offsets = [0, 0], sizes = [2, 192], strides = [1, 1]} : vector<2x256xf32> to vector<2x192xf32>
    %cst_45 = arith.constant 5.000000e-01 : f32
    %96 = vector.broadcast %cst_45 : f32 to vector<2x192xf32>
    %97 = arith.mulf %96, %95 : vector<2x192xf32>
    %98 = math.tanh %97 : vector<2x192xf32>
    %cst_46 = arith.constant 5.000000e-01 : f32
    %99 = vector.broadcast %cst_46 : f32 to vector<2x192xf32>
    %100 = arith.mulf %98, %99 : vector<2x192xf32>
    %cst_47 = arith.constant 5.000000e-01 : f32
    %101 = vector.broadcast %cst_47 : f32 to vector<2x192xf32>
    %102 = arith.addf %100, %101 : vector<2x192xf32>
    %103 = vector.extract_strided_slice %94 {offsets = [0, 192], sizes = [2, 64], strides = [1, 1]} : vector<2x256xf32> to vector<2x64xf32>
    %104 = math.tanh %103 : vector<2x64xf32>
    %105 = vector.extract_strided_slice %102 {offsets = [0, 0], sizes = [2, 64], strides = [1, 1]} : vector<2x192xf32> to vector<2x64xf32>
    %106 = vector.extract_strided_slice %102 {offsets = [0, 64], sizes = [2, 64], strides = [1, 1]} : vector<2x192xf32> to vector<2x64xf32>
    %107 = vector.extract_strided_slice %102 {offsets = [0, 128], sizes = [2, 64], strides = [1, 1]} : vector<2x192xf32> to vector<2x64xf32>
    %108 = arith.mulf %106, %65 : vector<2x64xf32>
    %109 = arith.mulf %105, %104 : vector<2x64xf32>
    %110 = arith.addf %108, %109 : vector<2x64xf32>
    %111 = math.tanh %110 : vector<2x64xf32>
    %112 = arith.mulf %107, %111 : vector<2x64xf32>
    %cst_48 = arith.constant dense<0.000000e+00> : vector<2x256xf32>
    %113 = tpu.matmul %112, %1, %cst_48 {dimension_numbers = #tpu.dot_dimension_numbers<[1], [0], [0], [1], [0, 0, 1, 1], [], []>} : vector<2x64xf32>, vector<64x256xf32>, vector<2x256xf32> -> vector<2x256xf32>
    %cst_49 = arith.constant dense<0.000000e+00> : vector<2x256xf32>
    %114 = tpu.matmul %89, %2, %cst_49 {dimension_numbers = #tpu.dot_dimension_numbers<[1], [0], [0], [1], [0, 0, 1, 1], [], []>} : vector<2x64xf32>, vector<64x256xf32>, vector<2x256xf32> -> vector<2x256xf32>
    %115 = arith.addf %113, %114 : vector<2x256xf32>
    %116 = arith.addf %115, %43 : vector<2x256xf32>
    %117 = vector.extract_strided_slice %116 {offsets = [0, 0], sizes = [2, 192], strides = [1, 1]} : vector<2x256xf32> to vector<2x192xf32>
    %cst_50 = arith.constant 5.000000e-01 : f32
    %118 = vector.broadcast %cst_50 : f32 to vector<2x192xf32>
    %119 = arith.mulf %118, %117 : vector<2x192xf32>
    %120 = math.tanh %119 : vector<2x192xf32>
    %cst_51 = arith.constant 5.000000e-01 : f32
    %121 = vector.broadcast %cst_51 : f32 to vector<2x192xf32>
    %122 = arith.mulf %120, %121 : vector<2x192xf32>
    %cst_52 = arith.constant 5.000000e-01 : f32
    %123 = vector.broadcast %cst_52 : f32 to vector<2x192xf32>
    %124 = arith.addf %122, %123 : vector<2x192xf32>
    %125 = vector.extract_strided_slice %116 {offsets = [0, 192], sizes = [2, 64], strides = [1, 1]} : vector<2x256xf32> to vector<2x64xf32>
    %126 = math.tanh %125 : vector<2x64xf32>
    %127 = vector.extract_strided_slice %124 {offsets = [0, 0], sizes = [2, 64], strides = [1, 1]} : vector<2x192xf32> to vector<2x64xf32>
    %128 = vector.extract_strided_slice %124 {offsets = [0, 64], sizes = [2, 64], strides = [1, 1]} : vector<2x192xf32> to vector<2x64xf32>
    %129 = vector.extract_strided_slice %124 {offsets = [0, 128], sizes = [2, 64], strides = [1, 1]} : vector<2x192xf32> to vector<2x64xf32>
    %130 = arith.mulf %128, %87 : vector<2x64xf32>
    %131 = arith.mulf %127, %126 : vector<2x64xf32>
    %132 = arith.addf %130, %131 : vector<2x64xf32>
    %133 = math.tanh %132 : vector<2x64xf32>
    %134 = arith.mulf %129, %133 : vector<2x64xf32>
    %c2_i32 = arith.constant 2 : i32
    %135 = arith.index_cast %c2_i32 : i32 to index
    %c0_53 = arith.constant 0 : index
    %c0_54 = arith.constant 0 : index
    %136 = vector.load %arg11[%135, %c0_53, %c0_54] : memref<8x2x256xf32, #tpu.memory_space<vmem>>, vector<1x2x256xf32>
    %137 = vector.shape_cast %136 : vector<1x2x256xf32> to vector<2x256xf32>
    %cst_55 = arith.constant dense<0.000000e+00> : vector<2x256xf32>
    %138 = tpu.matmul %112, %0, %cst_55 {dimension_numbers = #tpu.dot_dimension_numbers<[1], [0], [0], [1], [0, 0, 1, 1], [], []>} : vector<2x64xf32>, vector<64x256xf32>, vector<2x256xf32> -> vector<2x256xf32>
    %139 = arith.addf %137, %138 : vector<2x256xf32>
    %140 = vector.extract_strided_slice %139 {offsets = [0, 0], sizes = [2, 192], strides = [1, 1]} : vector<2x256xf32> to vector<2x192xf32>
    %cst_56 = arith.constant 5.000000e-01 : f32
    %141 = vector.broadcast %cst_56 : f32 to vector<2x192xf32>
    %142 = arith.mulf %141, %140 : vector<2x192xf32>
    %143 = math.tanh %142 : vector<2x192xf32>
    %cst_57 = arith.constant 5.000000e-01 : f32
    %144 = vector.broadcast %cst_57 : f32 to vector<2x192xf32>
    %145 = arith.mulf %143, %144 : vector<2x192xf32>
    %cst_58 = arith.constant 5.000000e-01 : f32
    %146 = vector.broadcast %cst_58 : f32 to vector<2x192xf32>
    %147 = arith.addf %145, %146 : vector<2x192xf32>
    %148 = vector.extract_strided_slice %139 {offsets = [0, 192], sizes = [2, 64], strides = [1, 1]} : vector<2x256xf32> to vector<2x64xf32>
    %149 = math.tanh %148 : vector<2x64xf32>
    %150 = vector.extract_strided_slice %147 {offsets = [0, 0], sizes = [2, 64], strides = [1, 1]} : vector<2x192xf32> to vector<2x64xf32>
    %151 = vector.extract_strided_slice %147 {offsets = [0, 64], sizes = [2, 64], strides = [1, 1]} : vector<2x192xf32> to vector<2x64xf32>
    %152 = vector.extract_strided_slice %147 {offsets = [0, 128], sizes = [2, 64], strides = [1, 1]} : vector<2x192xf32> to vector<2x64xf32>
    %153 = arith.mulf %151, %110 : vector<2x64xf32>
    %154 = arith.mulf %150, %149 : vector<2x64xf32>
    %155 = arith.addf %153, %154 : vector<2x64xf32>
    %156 = math.tanh %155 : vector<2x64xf32>
    %157 = arith.mulf %152, %156 : vector<2x64xf32>
    %cst_59 = arith.constant dense<0.000000e+00> : vector<2x256xf32>
    %158 = tpu.matmul %157, %1, %cst_59 {dimension_numbers = #tpu.dot_dimension_numbers<[1], [0], [0], [1], [0, 0, 1, 1], [], []>} : vector<2x64xf32>, vector<64x256xf32>, vector<2x256xf32> -> vector<2x256xf32>
    %cst_60 = arith.constant dense<0.000000e+00> : vector<2x256xf32>
    %159 = tpu.matmul %134, %2, %cst_60 {dimension_numbers = #tpu.dot_dimension_numbers<[1], [0], [0], [1], [0, 0, 1, 1], [], []>} : vector<2x64xf32>, vector<64x256xf32>, vector<2x256xf32> -> vector<2x256xf32>
    %160 = arith.addf %158, %159 : vector<2x256xf32>
    %161 = arith.addf %160, %43 : vector<2x256xf32>
    %162 = vector.extract_strided_slice %161 {offsets = [0, 0], sizes = [2, 192], strides = [1, 1]} : vector<2x256xf32> to vector<2x192xf32>
    %cst_61 = arith.constant 5.000000e-01 : f32
    %163 = vector.broadcast %cst_61 : f32 to vector<2x192xf32>
    %164 = arith.mulf %163, %162 : vector<2x192xf32>
    %165 = math.tanh %164 : vector<2x192xf32>
    %cst_62 = arith.constant 5.000000e-01 : f32
    %166 = vector.broadcast %cst_62 : f32 to vector<2x192xf32>
    %167 = arith.mulf %165, %166 : vector<2x192xf32>
    %cst_63 = arith.constant 5.000000e-01 : f32
    %168 = vector.broadcast %cst_63 : f32 to vector<2x192xf32>
    %169 = arith.addf %167, %168 : vector<2x192xf32>
    %170 = vector.extract_strided_slice %161 {offsets = [0, 192], sizes = [2, 64], strides = [1, 1]} : vector<2x256xf32> to vector<2x64xf32>
    %171 = math.tanh %170 : vector<2x64xf32>
    %172 = vector.extract_strided_slice %169 {offsets = [0, 0], sizes = [2, 64], strides = [1, 1]} : vector<2x192xf32> to vector<2x64xf32>
    %173 = vector.extract_strided_slice %169 {offsets = [0, 64], sizes = [2, 64], strides = [1, 1]} : vector<2x192xf32> to vector<2x64xf32>
    %174 = vector.extract_strided_slice %169 {offsets = [0, 128], sizes = [2, 64], strides = [1, 1]} : vector<2x192xf32> to vector<2x64xf32>
    %175 = arith.mulf %173, %132 : vector<2x64xf32>
    %176 = arith.mulf %172, %171 : vector<2x64xf32>
    %177 = arith.addf %175, %176 : vector<2x64xf32>
    %178 = math.tanh %177 : vector<2x64xf32>
    %179 = arith.mulf %174, %178 : vector<2x64xf32>
    %c3_i32 = arith.constant 3 : i32
    %180 = arith.index_cast %c3_i32 : i32 to index
    %c0_64 = arith.constant 0 : index
    %c0_65 = arith.constant 0 : index
    %181 = vector.load %arg11[%180, %c0_64, %c0_65] : memref<8x2x256xf32, #tpu.memory_space<vmem>>, vector<1x2x256xf32>
    %182 = vector.shape_cast %181 : vector<1x2x256xf32> to vector<2x256xf32>
    %cst_66 = arith.constant dense<0.000000e+00> : vector<2x256xf32>
    %183 = tpu.matmul %157, %0, %cst_66 {dimension_numbers = #tpu.dot_dimension_numbers<[1], [0], [0], [1], [0, 0, 1, 1], [], []>} : vector<2x64xf32>, vector<64x256xf32>, vector<2x256xf32> -> vector<2x256xf32>
    %184 = arith.addf %182, %183 : vector<2x256xf32>
    %185 = vector.extract_strided_slice %184 {offsets = [0, 0], sizes = [2, 192], strides = [1, 1]} : vector<2x256xf32> to vector<2x192xf32>
    %cst_67 = arith.constant 5.000000e-01 : f32
    %186 = vector.broadcast %cst_67 : f32 to vector<2x192xf32>
    %187 = arith.mulf %186, %185 : vector<2x192xf32>
    %188 = math.tanh %187 : vector<2x192xf32>
    %cst_68 = arith.constant 5.000000e-01 : f32
    %189 = vector.broadcast %cst_68 : f32 to vector<2x192xf32>
    %190 = arith.mulf %188, %189 : vector<2x192xf32>
    %cst_69 = arith.constant 5.000000e-01 : f32
    %191 = vector.broadcast %cst_69 : f32 to vector<2x192xf32>
    %192 = arith.addf %190, %191 : vector<2x192xf32>
    %193 = vector.extract_strided_slice %184 {offsets = [0, 192], sizes = [2, 64], strides = [1, 1]} : vector<2x256xf32> to vector<2x64xf32>
    %194 = math.tanh %193 : vector<2x64xf32>
    %195 = vector.extract_strided_slice %192 {offsets = [0, 0], sizes = [2, 64], strides = [1, 1]} : vector<2x192xf32> to vector<2x64xf32>
    %196 = vector.extract_strided_slice %192 {offsets = [0, 64], sizes = [2, 64], strides = [1, 1]} : vector<2x192xf32> to vector<2x64xf32>
    %197 = vector.extract_strided_slice %192 {offsets = [0, 128], sizes = [2, 64], strides = [1, 1]} : vector<2x192xf32> to vector<2x64xf32>
    %198 = arith.mulf %196, %155 : vector<2x64xf32>
    %199 = arith.mulf %195, %194 : vector<2x64xf32>
    %200 = arith.addf %198, %199 : vector<2x64xf32>
    %201 = math.tanh %200 : vector<2x64xf32>
    %202 = arith.mulf %197, %201 : vector<2x64xf32>
    %cst_70 = arith.constant dense<0.000000e+00> : vector<2x256xf32>
    %203 = tpu.matmul %202, %1, %cst_70 {dimension_numbers = #tpu.dot_dimension_numbers<[1], [0], [0], [1], [0, 0, 1, 1], [], []>} : vector<2x64xf32>, vector<64x256xf32>, vector<2x256xf32> -> vector<2x256xf32>
    %cst_71 = arith.constant dense<0.000000e+00> : vector<2x256xf32>
    %204 = tpu.matmul %179, %2, %cst_71 {dimension_numbers = #tpu.dot_dimension_numbers<[1], [0], [0], [1], [0, 0, 1, 1], [], []>} : vector<2x64xf32>, vector<64x256xf32>, vector<2x256xf32> -> vector<2x256xf32>
    %205 = arith.addf %203, %204 : vector<2x256xf32>
    %206 = arith.addf %205, %43 : vector<2x256xf32>
    %207 = vector.extract_strided_slice %206 {offsets = [0, 0], sizes = [2, 192], strides = [1, 1]} : vector<2x256xf32> to vector<2x192xf32>
    %cst_72 = arith.constant 5.000000e-01 : f32
    %208 = vector.broadcast %cst_72 : f32 to vector<2x192xf32>
    %209 = arith.mulf %208, %207 : vector<2x192xf32>
    %210 = math.tanh %209 : vector<2x192xf32>
    %cst_73 = arith.constant 5.000000e-01 : f32
    %211 = vector.broadcast %cst_73 : f32 to vector<2x192xf32>
    %212 = arith.mulf %210, %211 : vector<2x192xf32>
    %cst_74 = arith.constant 5.000000e-01 : f32
    %213 = vector.broadcast %cst_74 : f32 to vector<2x192xf32>
    %214 = arith.addf %212, %213 : vector<2x192xf32>
    %215 = vector.extract_strided_slice %206 {offsets = [0, 192], sizes = [2, 64], strides = [1, 1]} : vector<2x256xf32> to vector<2x64xf32>
    %216 = math.tanh %215 : vector<2x64xf32>
    %217 = vector.extract_strided_slice %214 {offsets = [0, 0], sizes = [2, 64], strides = [1, 1]} : vector<2x192xf32> to vector<2x64xf32>
    %218 = vector.extract_strided_slice %214 {offsets = [0, 64], sizes = [2, 64], strides = [1, 1]} : vector<2x192xf32> to vector<2x64xf32>
    %219 = vector.extract_strided_slice %214 {offsets = [0, 128], sizes = [2, 64], strides = [1, 1]} : vector<2x192xf32> to vector<2x64xf32>
    %220 = arith.mulf %218, %177 : vector<2x64xf32>
    %221 = arith.mulf %217, %216 : vector<2x64xf32>
    %222 = arith.addf %220, %221 : vector<2x64xf32>
    %223 = math.tanh %222 : vector<2x64xf32>
    %224 = arith.mulf %219, %223 : vector<2x64xf32>
    %c4_i32 = arith.constant 4 : i32
    %225 = arith.index_cast %c4_i32 : i32 to index
    %c0_75 = arith.constant 0 : index
    %c0_76 = arith.constant 0 : index
    %226 = vector.load %arg11[%225, %c0_75, %c0_76] : memref<8x2x256xf32, #tpu.memory_space<vmem>>, vector<1x2x256xf32>
    %227 = vector.shape_cast %226 : vector<1x2x256xf32> to vector<2x256xf32>
    %cst_77 = arith.constant dense<0.000000e+00> : vector<2x256xf32>
    %228 = tpu.matmul %202, %0, %cst_77 {dimension_numbers = #tpu.dot_dimension_numbers<[1], [0], [0], [1], [0, 0, 1, 1], [], []>} : vector<2x64xf32>, vector<64x256xf32>, vector<2x256xf32> -> vector<2x256xf32>
    %229 = arith.addf %227, %228 : vector<2x256xf32>
    %230 = vector.extract_strided_slice %229 {offsets = [0, 0], sizes = [2, 192], strides = [1, 1]} : vector<2x256xf32> to vector<2x192xf32>
    %cst_78 = arith.constant 5.000000e-01 : f32
    %231 = vector.broadcast %cst_78 : f32 to vector<2x192xf32>
    %232 = arith.mulf %231, %230 : vector<2x192xf32>
    %233 = math.tanh %232 : vector<2x192xf32>
    %cst_79 = arith.constant 5.000000e-01 : f32
    %234 = vector.broadcast %cst_79 : f32 to vector<2x192xf32>
    %235 = arith.mulf %233, %234 : vector<2x192xf32>
    %cst_80 = arith.constant 5.000000e-01 : f32
    %236 = vector.broadcast %cst_80 : f32 to vector<2x192xf32>
    %237 = arith.addf %235, %236 : vector<2x192xf32>
    %238 = vector.extract_strided_slice %229 {offsets = [0, 192], sizes = [2, 64], strides = [1, 1]} : vector<2x256xf32> to vector<2x64xf32>
    %239 = math.tanh %238 : vector<2x64xf32>
    %240 = vector.extract_strided_slice %237 {offsets = [0, 0], sizes = [2, 64], strides = [1, 1]} : vector<2x192xf32> to vector<2x64xf32>
    %241 = vector.extract_strided_slice %237 {offsets = [0, 64], sizes = [2, 64], strides = [1, 1]} : vector<2x192xf32> to vector<2x64xf32>
    %242 = vector.extract_strided_slice %237 {offsets = [0, 128], sizes = [2, 64], strides = [1, 1]} : vector<2x192xf32> to vector<2x64xf32>
    %243 = arith.mulf %241, %200 : vector<2x64xf32>
    %244 = arith.mulf %240, %239 : vector<2x64xf32>
    %245 = arith.addf %243, %244 : vector<2x64xf32>
    %246 = math.tanh %245 : vector<2x64xf32>
    %247 = arith.mulf %242, %246 : vector<2x64xf32>
    %cst_81 = arith.constant dense<0.000000e+00> : vector<2x256xf32>
    %248 = tpu.matmul %247, %1, %cst_81 {dimension_numbers = #tpu.dot_dimension_numbers<[1], [0], [0], [1], [0, 0, 1, 1], [], []>} : vector<2x64xf32>, vector<64x256xf32>, vector<2x256xf32> -> vector<2x256xf32>
    %cst_82 = arith.constant dense<0.000000e+00> : vector<2x256xf32>
    %249 = tpu.matmul %224, %2, %cst_82 {dimension_numbers = #tpu.dot_dimension_numbers<[1], [0], [0], [1], [0, 0, 1, 1], [], []>} : vector<2x64xf32>, vector<64x256xf32>, vector<2x256xf32> -> vector<2x256xf32>
    %250 = arith.addf %248, %249 : vector<2x256xf32>
    %251 = arith.addf %250, %43 : vector<2x256xf32>
    %252 = vector.extract_strided_slice %251 {offsets = [0, 0], sizes = [2, 192], strides = [1, 1]} : vector<2x256xf32> to vector<2x192xf32>
    %cst_83 = arith.constant 5.000000e-01 : f32
    %253 = vector.broadcast %cst_83 : f32 to vector<2x192xf32>
    %254 = arith.mulf %253, %252 : vector<2x192xf32>
    %255 = math.tanh %254 : vector<2x192xf32>
    %cst_84 = arith.constant 5.000000e-01 : f32
    %256 = vector.broadcast %cst_84 : f32 to vector<2x192xf32>
    %257 = arith.mulf %255, %256 : vector<2x192xf32>
    %cst_85 = arith.constant 5.000000e-01 : f32
    %258 = vector.broadcast %cst_85 : f32 to vector<2x192xf32>
    %259 = arith.addf %257, %258 : vector<2x192xf32>
    %260 = vector.extract_strided_slice %251 {offsets = [0, 192], sizes = [2, 64], strides = [1, 1]} : vector<2x256xf32> to vector<2x64xf32>
    %261 = math.tanh %260 : vector<2x64xf32>
    %262 = vector.extract_strided_slice %259 {offsets = [0, 0], sizes = [2, 64], strides = [1, 1]} : vector<2x192xf32> to vector<2x64xf32>
    %263 = vector.extract_strided_slice %259 {offsets = [0, 64], sizes = [2, 64], strides = [1, 1]} : vector<2x192xf32> to vector<2x64xf32>
    %264 = vector.extract_strided_slice %259 {offsets = [0, 128], sizes = [2, 64], strides = [1, 1]} : vector<2x192xf32> to vector<2x64xf32>
    %265 = arith.mulf %263, %222 : vector<2x64xf32>
    %266 = arith.mulf %262, %261 : vector<2x64xf32>
    %267 = arith.addf %265, %266 : vector<2x64xf32>
    %268 = math.tanh %267 : vector<2x64xf32>
    %269 = arith.mulf %264, %268 : vector<2x64xf32>
    %c5_i32 = arith.constant 5 : i32
    %270 = arith.index_cast %c5_i32 : i32 to index
    %c0_86 = arith.constant 0 : index
    %c0_87 = arith.constant 0 : index
    %271 = vector.load %arg11[%270, %c0_86, %c0_87] : memref<8x2x256xf32, #tpu.memory_space<vmem>>, vector<1x2x256xf32>
    %272 = vector.shape_cast %271 : vector<1x2x256xf32> to vector<2x256xf32>
    %cst_88 = arith.constant dense<0.000000e+00> : vector<2x256xf32>
    %273 = tpu.matmul %247, %0, %cst_88 {dimension_numbers = #tpu.dot_dimension_numbers<[1], [0], [0], [1], [0, 0, 1, 1], [], []>} : vector<2x64xf32>, vector<64x256xf32>, vector<2x256xf32> -> vector<2x256xf32>
    %274 = arith.addf %272, %273 : vector<2x256xf32>
    %275 = vector.extract_strided_slice %274 {offsets = [0, 0], sizes = [2, 192], strides = [1, 1]} : vector<2x256xf32> to vector<2x192xf32>
    %cst_89 = arith.constant 5.000000e-01 : f32
    %276 = vector.broadcast %cst_89 : f32 to vector<2x192xf32>
    %277 = arith.mulf %276, %275 : vector<2x192xf32>
    %278 = math.tanh %277 : vector<2x192xf32>
    %cst_90 = arith.constant 5.000000e-01 : f32
    %279 = vector.broadcast %cst_90 : f32 to vector<2x192xf32>
    %280 = arith.mulf %278, %279 : vector<2x192xf32>
    %cst_91 = arith.constant 5.000000e-01 : f32
    %281 = vector.broadcast %cst_91 : f32 to vector<2x192xf32>
    %282 = arith.addf %280, %281 : vector<2x192xf32>
    %283 = vector.extract_strided_slice %274 {offsets = [0, 192], sizes = [2, 64], strides = [1, 1]} : vector<2x256xf32> to vector<2x64xf32>
    %284 = math.tanh %283 : vector<2x64xf32>
    %285 = vector.extract_strided_slice %282 {offsets = [0, 0], sizes = [2, 64], strides = [1, 1]} : vector<2x192xf32> to vector<2x64xf32>
    %286 = vector.extract_strided_slice %282 {offsets = [0, 64], sizes = [2, 64], strides = [1, 1]} : vector<2x192xf32> to vector<2x64xf32>
    %287 = vector.extract_strided_slice %282 {offsets = [0, 128], sizes = [2, 64], strides = [1, 1]} : vector<2x192xf32> to vector<2x64xf32>
    %288 = arith.mulf %286, %245 : vector<2x64xf32>
    %289 = arith.mulf %285, %284 : vector<2x64xf32>
    %290 = arith.addf %288, %289 : vector<2x64xf32>
    %291 = math.tanh %290 : vector<2x64xf32>
    %292 = arith.mulf %287, %291 : vector<2x64xf32>
    %cst_92 = arith.constant dense<0.000000e+00> : vector<2x256xf32>
    %293 = tpu.matmul %292, %1, %cst_92 {dimension_numbers = #tpu.dot_dimension_numbers<[1], [0], [0], [1], [0, 0, 1, 1], [], []>} : vector<2x64xf32>, vector<64x256xf32>, vector<2x256xf32> -> vector<2x256xf32>
    %cst_93 = arith.constant dense<0.000000e+00> : vector<2x256xf32>
    %294 = tpu.matmul %269, %2, %cst_93 {dimension_numbers = #tpu.dot_dimension_numbers<[1], [0], [0], [1], [0, 0, 1, 1], [], []>} : vector<2x64xf32>, vector<64x256xf32>, vector<2x256xf32> -> vector<2x256xf32>
    %295 = arith.addf %293, %294 : vector<2x256xf32>
    %296 = arith.addf %295, %43 : vector<2x256xf32>
    %297 = vector.extract_strided_slice %296 {offsets = [0, 0], sizes = [2, 192], strides = [1, 1]} : vector<2x256xf32> to vector<2x192xf32>
    %cst_94 = arith.constant 5.000000e-01 : f32
    %298 = vector.broadcast %cst_94 : f32 to vector<2x192xf32>
    %299 = arith.mulf %298, %297 : vector<2x192xf32>
    %300 = math.tanh %299 : vector<2x192xf32>
    %cst_95 = arith.constant 5.000000e-01 : f32
    %301 = vector.broadcast %cst_95 : f32 to vector<2x192xf32>
    %302 = arith.mulf %300, %301 : vector<2x192xf32>
    %cst_96 = arith.constant 5.000000e-01 : f32
    %303 = vector.broadcast %cst_96 : f32 to vector<2x192xf32>
    %304 = arith.addf %302, %303 : vector<2x192xf32>
    %305 = vector.extract_strided_slice %296 {offsets = [0, 192], sizes = [2, 64], strides = [1, 1]} : vector<2x256xf32> to vector<2x64xf32>
    %306 = math.tanh %305 : vector<2x64xf32>
    %307 = vector.extract_strided_slice %304 {offsets = [0, 0], sizes = [2, 64], strides = [1, 1]} : vector<2x192xf32> to vector<2x64xf32>
    %308 = vector.extract_strided_slice %304 {offsets = [0, 64], sizes = [2, 64], strides = [1, 1]} : vector<2x192xf32> to vector<2x64xf32>
    %309 = vector.extract_strided_slice %304 {offsets = [0, 128], sizes = [2, 64], strides = [1, 1]} : vector<2x192xf32> to vector<2x64xf32>
    %310 = arith.mulf %308, %267 : vector<2x64xf32>
    %311 = arith.mulf %307, %306 : vector<2x64xf32>
    %312 = arith.addf %310, %311 : vector<2x64xf32>
    %313 = math.tanh %312 : vector<2x64xf32>
    %314 = arith.mulf %309, %313 : vector<2x64xf32>
    %c6_i32 = arith.constant 6 : i32
    %315 = arith.index_cast %c6_i32 : i32 to index
    %c0_97 = arith.constant 0 : index
    %c0_98 = arith.constant 0 : index
    %316 = vector.load %arg11[%315, %c0_97, %c0_98] : memref<8x2x256xf32, #tpu.memory_space<vmem>>, vector<1x2x256xf32>
    %317 = vector.shape_cast %316 : vector<1x2x256xf32> to vector<2x256xf32>
    %cst_99 = arith.constant dense<0.000000e+00> : vector<2x256xf32>
    %318 = tpu.matmul %292, %0, %cst_99 {dimension_numbers = #tpu.dot_dimension_numbers<[1], [0], [0], [1], [0, 0, 1, 1], [], []>} : vector<2x64xf32>, vector<64x256xf32>, vector<2x256xf32> -> vector<2x256xf32>
    %319 = arith.addf %317, %318 : vector<2x256xf32>
    %320 = vector.extract_strided_slice %319 {offsets = [0, 0], sizes = [2, 192], strides = [1, 1]} : vector<2x256xf32> to vector<2x192xf32>
    %cst_100 = arith.constant 5.000000e-01 : f32
    %321 = vector.broadcast %cst_100 : f32 to vector<2x192xf32>
    %322 = arith.mulf %321, %320 : vector<2x192xf32>
    %323 = math.tanh %322 : vector<2x192xf32>
    %cst_101 = arith.constant 5.000000e-01 : f32
    %324 = vector.broadcast %cst_101 : f32 to vector<2x192xf32>
    %325 = arith.mulf %323, %324 : vector<2x192xf32>
    %cst_102 = arith.constant 5.000000e-01 : f32
    %326 = vector.broadcast %cst_102 : f32 to vector<2x192xf32>
    %327 = arith.addf %325, %326 : vector<2x192xf32>
    %328 = vector.extract_strided_slice %319 {offsets = [0, 192], sizes = [2, 64], strides = [1, 1]} : vector<2x256xf32> to vector<2x64xf32>
    %329 = math.tanh %328 : vector<2x64xf32>
    %330 = vector.extract_strided_slice %327 {offsets = [0, 0], sizes = [2, 64], strides = [1, 1]} : vector<2x192xf32> to vector<2x64xf32>
    %331 = vector.extract_strided_slice %327 {offsets = [0, 64], sizes = [2, 64], strides = [1, 1]} : vector<2x192xf32> to vector<2x64xf32>
    %332 = vector.extract_strided_slice %327 {offsets = [0, 128], sizes = [2, 64], strides = [1, 1]} : vector<2x192xf32> to vector<2x64xf32>
    %333 = arith.mulf %331, %290 : vector<2x64xf32>
    %334 = arith.mulf %330, %329 : vector<2x64xf32>
    %335 = arith.addf %333, %334 : vector<2x64xf32>
    %336 = math.tanh %335 : vector<2x64xf32>
    %337 = arith.mulf %332, %336 : vector<2x64xf32>
    %cst_103 = arith.constant dense<0.000000e+00> : vector<2x256xf32>
    %338 = tpu.matmul %337, %1, %cst_103 {dimension_numbers = #tpu.dot_dimension_numbers<[1], [0], [0], [1], [0, 0, 1, 1], [], []>} : vector<2x64xf32>, vector<64x256xf32>, vector<2x256xf32> -> vector<2x256xf32>
    %cst_104 = arith.constant dense<0.000000e+00> : vector<2x256xf32>
    %339 = tpu.matmul %314, %2, %cst_104 {dimension_numbers = #tpu.dot_dimension_numbers<[1], [0], [0], [1], [0, 0, 1, 1], [], []>} : vector<2x64xf32>, vector<64x256xf32>, vector<2x256xf32> -> vector<2x256xf32>
    %340 = arith.addf %338, %339 : vector<2x256xf32>
    %341 = arith.addf %340, %43 : vector<2x256xf32>
    %342 = vector.extract_strided_slice %341 {offsets = [0, 0], sizes = [2, 192], strides = [1, 1]} : vector<2x256xf32> to vector<2x192xf32>
    %cst_105 = arith.constant 5.000000e-01 : f32
    %343 = vector.broadcast %cst_105 : f32 to vector<2x192xf32>
    %344 = arith.mulf %343, %342 : vector<2x192xf32>
    %345 = math.tanh %344 : vector<2x192xf32>
    %cst_106 = arith.constant 5.000000e-01 : f32
    %346 = vector.broadcast %cst_106 : f32 to vector<2x192xf32>
    %347 = arith.mulf %345, %346 : vector<2x192xf32>
    %cst_107 = arith.constant 5.000000e-01 : f32
    %348 = vector.broadcast %cst_107 : f32 to vector<2x192xf32>
    %349 = arith.addf %347, %348 : vector<2x192xf32>
    %350 = vector.extract_strided_slice %341 {offsets = [0, 192], sizes = [2, 64], strides = [1, 1]} : vector<2x256xf32> to vector<2x64xf32>
    %351 = math.tanh %350 : vector<2x64xf32>
    %352 = vector.extract_strided_slice %349 {offsets = [0, 0], sizes = [2, 64], strides = [1, 1]} : vector<2x192xf32> to vector<2x64xf32>
    %353 = vector.extract_strided_slice %349 {offsets = [0, 64], sizes = [2, 64], strides = [1, 1]} : vector<2x192xf32> to vector<2x64xf32>
    %354 = vector.extract_strided_slice %349 {offsets = [0, 128], sizes = [2, 64], strides = [1, 1]} : vector<2x192xf32> to vector<2x64xf32>
    %355 = arith.mulf %353, %312 : vector<2x64xf32>
    %356 = arith.mulf %352, %351 : vector<2x64xf32>
    %357 = arith.addf %355, %356 : vector<2x64xf32>
    %358 = math.tanh %357 : vector<2x64xf32>
    %359 = arith.mulf %354, %358 : vector<2x64xf32>
    %c7_i32 = arith.constant 7 : i32
    %360 = arith.index_cast %c7_i32 : i32 to index
    %c0_108 = arith.constant 0 : index
    %c0_109 = arith.constant 0 : index
    %361 = vector.load %arg11[%360, %c0_108, %c0_109] : memref<8x2x256xf32, #tpu.memory_space<vmem>>, vector<1x2x256xf32>
    %362 = vector.shape_cast %361 : vector<1x2x256xf32> to vector<2x256xf32>
    %cst_110 = arith.constant dense<0.000000e+00> : vector<2x256xf32>
    %363 = tpu.matmul %337, %0, %cst_110 {dimension_numbers = #tpu.dot_dimension_numbers<[1], [0], [0], [1], [0, 0, 1, 1], [], []>} : vector<2x64xf32>, vector<64x256xf32>, vector<2x256xf32> -> vector<2x256xf32>
    %364 = arith.addf %362, %363 : vector<2x256xf32>
    %365 = vector.extract_strided_slice %364 {offsets = [0, 0], sizes = [2, 192], strides = [1, 1]} : vector<2x256xf32> to vector<2x192xf32>
    %cst_111 = arith.constant 5.000000e-01 : f32
    %366 = vector.broadcast %cst_111 : f32 to vector<2x192xf32>
    %367 = arith.mulf %366, %365 : vector<2x192xf32>
    %368 = math.tanh %367 : vector<2x192xf32>
    %cst_112 = arith.constant 5.000000e-01 : f32
    %369 = vector.broadcast %cst_112 : f32 to vector<2x192xf32>
    %370 = arith.mulf %368, %369 : vector<2x192xf32>
    %cst_113 = arith.constant 5.000000e-01 : f32
    %371 = vector.broadcast %cst_113 : f32 to vector<2x192xf32>
    %372 = arith.addf %370, %371 : vector<2x192xf32>
    %373 = vector.extract_strided_slice %364 {offsets = [0, 192], sizes = [2, 64], strides = [1, 1]} : vector<2x256xf32> to vector<2x64xf32>
    %374 = math.tanh %373 : vector<2x64xf32>
    %375 = vector.extract_strided_slice %372 {offsets = [0, 0], sizes = [2, 64], strides = [1, 1]} : vector<2x192xf32> to vector<2x64xf32>
    %376 = vector.extract_strided_slice %372 {offsets = [0, 64], sizes = [2, 64], strides = [1, 1]} : vector<2x192xf32> to vector<2x64xf32>
    %377 = vector.extract_strided_slice %372 {offsets = [0, 128], sizes = [2, 64], strides = [1, 1]} : vector<2x192xf32> to vector<2x64xf32>
    %378 = arith.mulf %376, %335 : vector<2x64xf32>
    %379 = arith.mulf %375, %374 : vector<2x64xf32>
    %380 = arith.addf %378, %379 : vector<2x64xf32>
    %381 = math.tanh %380 : vector<2x64xf32>
    %382 = arith.mulf %377, %381 : vector<2x64xf32>
    %cst_114 = arith.constant dense<0.000000e+00> : vector<2x256xf32>
    %383 = tpu.matmul %382, %1, %cst_114 {dimension_numbers = #tpu.dot_dimension_numbers<[1], [0], [0], [1], [0, 0, 1, 1], [], []>} : vector<2x64xf32>, vector<64x256xf32>, vector<2x256xf32> -> vector<2x256xf32>
    %cst_115 = arith.constant dense<0.000000e+00> : vector<2x256xf32>
    %384 = tpu.matmul %359, %2, %cst_115 {dimension_numbers = #tpu.dot_dimension_numbers<[1], [0], [0], [1], [0, 0, 1, 1], [], []>} : vector<2x64xf32>, vector<64x256xf32>, vector<2x256xf32> -> vector<2x256xf32>
    %385 = arith.addf %383, %384 : vector<2x256xf32>
    %386 = arith.addf %385, %43 : vector<2x256xf32>
    %387 = vector.extract_strided_slice %386 {offsets = [0, 0], sizes = [2, 192], strides = [1, 1]} : vector<2x256xf32> to vector<2x192xf32>
    %cst_116 = arith.constant 5.000000e-01 : f32
    %388 = vector.broadcast %cst_116 : f32 to vector<2x192xf32>
    %389 = arith.mulf %388, %387 : vector<2x192xf32>
    %390 = math.tanh %389 : vector<2x192xf32>
    %cst_117 = arith.constant 5.000000e-01 : f32
    %391 = vector.broadcast %cst_117 : f32 to vector<2x192xf32>
    %392 = arith.mulf %390, %391 : vector<2x192xf32>
    %cst_118 = arith.constant 5.000000e-01 : f32
    %393 = vector.broadcast %cst_118 : f32 to vector<2x192xf32>
    %394 = arith.addf %392, %393 : vector<2x192xf32>
    %395 = vector.extract_strided_slice %386 {offsets = [0, 192], sizes = [2, 64], strides = [1, 1]} : vector<2x256xf32> to vector<2x64xf32>
    %396 = math.tanh %395 : vector<2x64xf32>
    %397 = vector.extract_strided_slice %394 {offsets = [0, 0], sizes = [2, 64], strides = [1, 1]} : vector<2x192xf32> to vector<2x64xf32>
    %398 = vector.extract_strided_slice %394 {offsets = [0, 64], sizes = [2, 64], strides = [1, 1]} : vector<2x192xf32> to vector<2x64xf32>
    %399 = vector.extract_strided_slice %394 {offsets = [0, 128], sizes = [2, 64], strides = [1, 1]} : vector<2x192xf32> to vector<2x64xf32>
    %400 = arith.mulf %398, %357 : vector<2x64xf32>
    %401 = arith.mulf %397, %396 : vector<2x64xf32>
    %402 = arith.addf %400, %401 : vector<2x64xf32>
    %403 = math.tanh %402 : vector<2x64xf32>
    %404 = arith.mulf %399, %403 : vector<2x64xf32>
    %c8_i32 = arith.constant 8 : i32
    %c0_119 = arith.constant 0 : index
    %c0_120 = arith.constant 0 : index
    %405 = vector.load %arg8[%c0_119, %c0_120] : memref<64x5xf32, #tpu.memory_space<vmem>>, vector<64x5xf32>
    %cst_121 = arith.constant dense<0.000000e+00> : vector<2x5xf32>
    %406 = tpu.matmul %404, %405, %cst_121 {dimension_numbers = #tpu.dot_dimension_numbers<[1], [0], [0], [1], [0, 0, 1, 1], [], []>} : vector<2x64xf32>, vector<64x5xf32>, vector<2x5xf32> -> vector<2x5xf32>
    %c0_122 = arith.constant 0 : index
    %c0_123 = arith.constant 0 : index
    %407 = vector.load %arg9[%c0_122, %c0_123] : memref<1x5xf32, #tpu.memory_space<vmem>>, vector<1x5xf32>
    %408 = vector.broadcast %407 : vector<1x5xf32> to vector<2x5xf32>
    %409 = arith.addf %406, %408 : vector<2x5xf32>
    %c0_124 = arith.constant 0 : index
    %c0_125 = arith.constant 0 : index
    %410 = vector.load %arg10[%c0_124, %c0_125] : memref<2x5xf32, #tpu.memory_space<vmem>>, vector<2x5xf32>
    tpu.vector_store %arg10[%c0_124, %c0_125], %409 {strides = array<i32>} : memref<2x5xf32, #tpu.memory_space<vmem>>, vector<2x5xf32>,
    return
  }
  func.func @transform_0(%arg0: i32) -> (i32, i32) {
    %c0_i32 = arith.constant 0 : i32
    %c0_i32_0 = arith.constant 0 : i32
    %c0_i32_1 = arith.constant 0 : i32
    return %c0_i32, %c0_i32_0 : i32, i32
  }
  func.func @transform_1(%arg0: i32) -> (i32, i32) {
    %c0_i32 = arith.constant 0 : i32
    %c0_i32_0 = arith.constant 0 : i32
    %c0_i32_1 = arith.constant 0 : i32
    return %c0_i32, %c0_i32_0 : i32, i32
  }
  func.func @transform_2(%arg0: i32) -> (i32, i32) {
    %c0_i32 = arith.constant 0 : i32
    %c0_i32_0 = arith.constant 0 : i32
    %c0_i32_1 = arith.constant 0 : i32
    return %c0_i32, %c0_i32_0 : i32, i32
  }
  func.func @transform_3(%arg0: i32) -> (i32, i32) {
    %c0_i32 = arith.constant 0 : i32
    %c0_i32_0 = arith.constant 0 : i32
    %c0_i32_1 = arith.constant 0 : i32
    return %c0_i32, %c0_i32_0 : i32, i32
  }
  func.func @transform_4(%arg0: i32) -> (i32, i32) {
    %c0_i32 = arith.constant 0 : i32
    %c0_i32_0 = arith.constant 0 : i32
    %c0_i32_1 = arith.constant 0 : i32
    return %c0_i32, %c0_i32_0 : i32, i32
  }
  func.func @transform_5(%arg0: i32) -> (i32, i32) {
    %c0_i32 = arith.constant 0 : i32
    %c0_i32_0 = arith.constant 0 : i32
    %c0_i32_1 = arith.constant 0 : i32
    return %c0_i32, %c0_i32_0 : i32, i32
  }
  func.func @transform_6(%arg0: i32) -> (i32, i32) {
    %c0_i32 = arith.constant 0 : i32
    %c0_i32_0 = arith.constant 0 : i32
    %c0_i32_1 = arith.constant 0 : i32
    return %c0_i32, %c0_i32_0 : i32, i32
  }
  func.func @transform_7(%arg0: i32) -> (i32, i32) {
    %c0_i32 = arith.constant 0 : i32
    %c0_i32_0 = arith.constant 0 : i32
    %c0_i32_1 = arith.constant 0 : i32
    return %c0_i32, %c0_i32_0 : i32, i32
  }
  func.func @transform_8(%arg0: i32) -> (i32, i32) {
    %c0_i32 = arith.constant 0 : i32
    %c0_i32_0 = arith.constant 0 : i32
    %c0_i32_1 = arith.constant 0 : i32
    return %c0_i32, %c0_i32_0 : i32, i32
  }
  func.func @transform_9(%arg0: i32) -> (i32, i32) {
    %c0_i32 = arith.constant 0 : i32
    %c0_i32_0 = arith.constant 0 : i32
    %c0_i32_1 = arith.constant 0 : i32
    return %c0_i32, %c0_i32_0 : i32, i32
  }
}

</mosaic_0001>

<llo_original>
// kernel: tpu_custom_call.1
$region0: #{tpu_custom_call.1}
  #allocation0 [shape = 'u32[]', space=smem, size = 0x4, offset = 0x4, fixed_abs, tag = 'smem constant byte address 0x4 - core index']
  #allocation1 [shape = 'u32[72,128]{1,0:T(1,128)}', space=vmem, size = 0x9000, scoped, tag = 'internal scratch']
  #allocation2 [shape = 'f32[8,2,256]{2,1,0:T(2,128)}', space=vmem, size = 0x4000, scoped, tag = 'scratch operand']
  %s0 = inlined_call_operand.vmem [shape: f32[16,20], index: 0, kind: input, shape index: {}]
  %s1 = inlined_call_operand.vmem [shape: f32[20,256], index: 1, kind: input, shape index: {}]
  %s2 = inlined_call_operand.hbm [shape: f32[64,256], index: 2, kind: input, shape index: {}]
  %s3 = inlined_call_operand.vmem [shape: f32[1,256], index: 3, kind: input, shape index: {}]
  %s4 = inlined_call_operand.hbm [shape: f32[64,256], index: 4, kind: input, shape index: {}]
  %s5 = inlined_call_operand.hbm [shape: f32[64,256], index: 5, kind: input, shape index: {}]
  %s6 = inlined_call_operand.vmem [shape: f32[1,256], index: 6, kind: input, shape index: {}]
  %s7 = inlined_call_operand.vmem [shape: f32[64,5], index: 7, kind: input, shape index: {}]
  %s8 = inlined_call_operand.vmem [shape: f32[1,5], index: 8, kind: input, shape index: {}]
  %s9 = inlined_call_operand.hbm [shape: f32[2,5], index: 9, kind: output, shape index: {}]
  %s10 = sld [smem:[#allocation0]]
  $region58: #{tpu_custom_call.1} parent=0
    _
  %s12 = ssub.s32 1, %s10
  %s13 = scalar_select 0, %s12, %s10
  $region1: #{tpu_custom_call.1} parent=0
    #allocation3 [shape = 'u8[65536]{0}', space=vmem, size = 0x10000, scoped, tag = 'input window, operand 2, single buffered']
    #allocation4 [shape = 's32[1]{0}', space=sflag, size = 0x4, scoped, tag = 'scoped memory for tpu_custom_call.1']
    #allocation5 [shape = 's32[1]{0}', space=sflag, size = 0x4, scoped, tag = 'scoped memory for tpu_custom_call.1']
    #allocation6 [shape = 'u8[65536]{0}', space=vmem, size = 0x10000, scoped, tag = 'input window, operand 4, single buffered']
    #allocation7 [shape = 's32[1]{0}', space=sflag, size = 0x4, scoped, tag = 'scoped memory for tpu_custom_call.1']
    #allocation8 [shape = 'u8[65536]{0}', space=vmem, size = 0x10000, scoped, tag = 'input window, operand 5, single buffered']
    #allocation9 [shape = 'u8[1024]{0}', space=vmem, size = 0x400, scoped, tag = 'output window, operand 0, single buffered']
    %14 = vsyncpa [#allocation4], 0
    %15 = vsyncpa [#allocation7], 0
    %16 = vsyncpa [#allocation5], 0
    // Predicated region
    $region2: #{tpu_custom_call.1} parent=1 // pred_check
      _
    $region3: #{tpu_custom_call.1} parent=1 // pred_check_branch
      %18 = sbr.rel (0) target = $region5
    $region4: #{tpu_custom_call.1} parent=1 // pred_region
      _
    $region5: #{tpu_custom_call.1} parent=1 // pred_fallthru
      _
    // Predicated region
    $region6: #{tpu_custom_call.1} parent=1 // pred_check
      _
    $region7: #{tpu_custom_call.1} parent=1 // pred_check_branch
      %20 = sbr.rel (0) target = $region9
    $region8: #{tpu_custom_call.1} parent=1 // pred_region
      _
    $region9: #{tpu_custom_call.1} parent=1 // pred_fallthru
      _
    // Predicated region
    $region10: #{tpu_custom_call.1} parent=1 // pred_check
      _
    $region11: #{tpu_custom_call.1} parent=1 // pred_check_branch
      %22 = sbr.rel (0) target = $region13
    $region12: #{tpu_custom_call.1} parent=1 // pred_region
      %24 = vsyncadd [#allocation4], 0
      %s25 = sshll.u32 %s2, 4
      %s26 = int_to_ptr.hbm [resolvable:$true] %s25
      %s27 = sshll.u32 [#allocation3], 4
      %s28 = int_to_ptr.vmem [resolvable:$true] %s27
      %33 = dma.hbm_to_vmem [thread:$0]  %s26, 2048, %s28, [#allocation4], 256, 256, 16
    $region13: #{tpu_custom_call.1} parent=1 // pred_fallthru
      _
    // Predicated region
    $region14: #{tpu_custom_call.1} parent=1 // pred_check
      _
    $region15: #{tpu_custom_call.1} parent=1 // pred_check_branch
      %35 = sbr.rel (0) target = $region17
    $region16: #{tpu_custom_call.1} parent=1 // pred_region
      _
    $region17: #{tpu_custom_call.1} parent=1 // pred_fallthru
      _
    // Predicated region
    $region18: #{tpu_custom_call.1} parent=1 // pred_check
      _
    $region19: #{tpu_custom_call.1} parent=1 // pred_check_branch
      %37 = sbr.rel (0) target = $region21
    $region20: #{tpu_custom_call.1} parent=1 // pred_region
      %39 = vsyncadd [#allocation7], 0
      %s40 = sshll.u32 %s4, 4
      %s41 = int_to_ptr.hbm [resolvable:$true] %s40
      %s42 = sshll.u32 [#allocation6], 4
      %s43 = int_to_ptr.vmem [resolvable:$true] %s42
      %48 = dma.hbm_to_vmem [thread:$0]  %s41, 2048, %s43, [#allocation7], 256, 256, 16
    $region21: #{tpu_custom_call.1} parent=1 // pred_fallthru
      _
    // Predicated region
    $region22: #{tpu_custom_call.1} parent=1 // pred_check
      _
    $region23: #{tpu_custom_call.1} parent=1 // pred_check_branch
      %50 = sbr.rel (0) target = $region25
    $region24: #{tpu_custom_call.1} parent=1 // pred_region
      %52 = vsyncadd [#allocation7], 0
      %s53 = sshll.u32 %s5, 4
      %s54 = int_to_ptr.hbm [resolvable:$true] %s53
      %s55 = sshll.u32 [#allocation8], 4
      %s56 = int_to_ptr.vmem [resolvable:$true] %s55
      %61 = dma.hbm_to_vmem [thread:$0]  %s54, 2048, %s56, [#allocation7], 256, 256, 16
    $region25: #{tpu_custom_call.1} parent=1 // pred_fallthru
      _
    // Predicated region
    $region26: #{tpu_custom_call.1} parent=1 // pred_check
      _
    $region27: #{tpu_custom_call.1} parent=1 // pred_check_branch
      %63 = sbr.rel (0) target = $region29
    $region28: #{tpu_custom_call.1} parent=1 // pred_region
      _
    $region29: #{tpu_custom_call.1} parent=1 // pred_fallthru
      _
    // Predicated region
    $region30: #{tpu_custom_call.1} parent=1 // pred_check
      _
    $region31: #{tpu_custom_call.1} parent=1 // pred_check_branch
      %65 = sbr.rel (0) target = $region33
    $region32: #{tpu_custom_call.1} parent=1 // pred_region
      _
    $region33: #{tpu_custom_call.1} parent=1 // pred_fallthru
      _
    // Predicated region
    $region34: #{tpu_custom_call.1} parent=1 // pred_check
      _
    $region35: #{tpu_custom_call.1} parent=1 // pred_check_branch
      %67 = sbr.rel (0) target = $region37
    $region36: #{tpu_custom_call.1} parent=1 // pred_region
      _
    $region37: #{tpu_custom_call.1} parent=1 // pred_fallthru
      _
    // Predicated region
    $region38: #{tpu_custom_call.1} parent=1 // pred_check
      _
    $region39: #{tpu_custom_call.1} parent=1 // pred_check_branch
      %69 = sbr.rel (0) target = $region41
    $region40: #{tpu_custom_call.1} parent=1 // pred_region
      %71 = dma.done [#allocation4], 2048
    $region41: #{tpu_custom_call.1} parent=1 // pred_fallthru
      _
    // Predicated region
    $region42: #{tpu_custom_call.1} parent=1 // pred_check
      _
    $region43: #{tpu_custom_call.1} parent=1 // pred_check_branch
      %73 = sbr.rel (0) target = $region45
    $region44: #{tpu_custom_call.1} parent=1 // pred_region
      %75 = dma.done [#allocation7], 2048
    $region45: #{tpu_custom_call.1} parent=1 // pred_fallthru
      _
    // Predicated region
    $region46: #{tpu_custom_call.1} parent=1 // pred_check
      _
    $region47: #{tpu_custom_call.1} parent=1 // pred_check_branch
      %77 = sbr.rel (0) target = $region49
    $region48: #{tpu_custom_call.1} parent=1 // pred_region
      %79 = dma.done [#allocation7], 2048
    $region49: #{tpu_custom_call.1} parent=1 // pred_fallthru
      _
    %v80 = vld [vmem:[#allocation3] sm:$0xff]
    %v81 = vld [vmem:[#allocation3 + $0x8] sm:$0xff]
    %v82 = vld [vmem:[#allocation3 + $0x10] sm:$0xff]
    %v83 = vld [vmem:[#allocation3 + $0x18] sm:$0xff]
    %v84 = vld [vmem:[#allocation3 + $0x20] sm:$0xff]
    %v85 = vld [vmem:[#allocation3 + $0x28] sm:$0xff]
    %v86 = vld [vmem:[#allocation3 + $0x30] sm:$0xff]
    %v87 = vld [vmem:[#allocation3 + $0x38] sm:$0xff]
    %v88 = vld [vmem:[#allocation3 + $0x40] sm:$0xff]
    %v89 = vld [vmem:[#allocation3 + $0x48] sm:$0xff]
    %v90 = vld [vmem:[#allocation3 + $0x50] sm:$0xff]
    %v91 = vld [vmem:[#allocation3 + $0x58] sm:$0xff]
    %v92 = vld [vmem:[#allocation3 + $0x60] sm:$0xff]
    %v93 = vld [vmem:[#allocation3 + $0x68] sm:$0xff]
    %v94 = vld [vmem:[#allocation3 + $0x70] sm:$0xff]
    %v95 = vld [vmem:[#allocation3 + $0x78] sm:$0xff]
    %v96 = vld [vmem:[#allocation6] sm:$0xff]
    %v97 = vld [vmem:[#allocation6 + $0x8] sm:$0xff]
    %v98 = vld [vmem:[#allocation6 + $0x10] sm:$0xff]
    %v99 = vld [vmem:[#allocation6 + $0x18] sm:$0xff]
    %v100 = vld [vmem:[#allocation6 + $0x20] sm:$0xff]
    %v101 = vld [vmem:[#allocation6 + $0x28] sm:$0xff]
    %v102 = vld [vmem:[#allocation6 + $0x30] sm:$0xff]
    %v103 = vld [vmem:[#allocation6 + $0x38] sm:$0xff]
    %v104 = vld [vmem:[#allocation6 + $0x40] sm:$0xff]
    %v105 = vld [vmem:[#allocation6 + $0x48] sm:$0xff]
    %v106 = vld [vmem:[#allocation6 + $0x50] sm:$0xff]
    %v107 = vld [vmem:[#allocation6 + $0x58] sm:$0xff]
    %v108 = vld [vmem:[#allocation6 + $0x60] sm:$0xff]
    %v109 = vld [vmem:[#allocation6 + $0x68] sm:$0xff]
    %v110 = vld [vmem:[#allocation6 + $0x70] sm:$0xff]
    %v111 = vld [vmem:[#allocation6 + $0x78] sm:$0xff]
    %v112 = vld [vmem:[#allocation8] sm:$0xff]
    %v113 = vld [vmem:[#allocation8 + $0x8] sm:$0xff]
    %v114 = vld [vmem:[#allocation8 + $0x10] sm:$0xff]
    %v115 = vld [vmem:[#allocation8 + $0x18] sm:$0xff]
    %v116 = vld [vmem:[#allocation8 + $0x20] sm:$0xff]
    %v117 = vld [vmem:[#allocation8 + $0x28] sm:$0xff]
    %v118 = vld [vmem:[#allocation8 + $0x30] sm:$0xff]
    %v119 = vld [vmem:[#allocation8 + $0x38] sm:$0xff]
    %v120 = vld [vmem:[#allocation8 + $0x40] sm:$0xff]
    %v121 = vld [vmem:[#allocation8 + $0x48] sm:$0xff]
    %v122 = vld [vmem:[#allocation8 + $0x50] sm:$0xff]
    %v123 = vld [vmem:[#allocation8 + $0x58] sm:$0xff]
    %v124 = vld [vmem:[#allocation8 + $0x60] sm:$0xff]
    %v125 = vld [vmem:[#allocation8 + $0x68] sm:$0xff]
    %v126 = vld [vmem:[#allocation8 + $0x70] sm:$0xff]
    %v127 = vld [vmem:[#allocation8 + $0x78] sm:$0xff]
    %v128 = vld [vmem:[%s0] sm:$0xff]
    %v129 = vld [vmem:[%s0 + $0x8] sm:$0xff]
    %v130 = vld [vmem:[%s1] sm:$0xff]
    %v131 = vld [vmem:[%s1 + $0x8] sm:$0xff]
    %v132 = vld [vmem:[%s1 + $0x10] sm:$0xff]
    %v133 = vld [vmem:[%s1 + $0x18] sm:$0xff]
    %v134 = vld [vmem:[%s1 + $0x20] sm:$0xf]
    %v135 = vld [vmem:[%s1 + $0x28] sm:$0xf]
    %v136 = vld [vmem:[%s3] sm:$0x3]
    %v138 = vperm.slane %v136, 0
    %v139 = vperm.slane %v136, 1
    %vm142 = vcmask 162816
    %v144 = vsel %vm142, %v128, 0
    %v147 = vsel %vm142, %v129, 0
    %vm149 = vcmask 1043456
    %v151 = vsel %vm149, %v134, 0
    %v154 = vsel %vm149, %v135, 0
    %156 = vmatpush.msra.mxu0 0.0
    %157 = vmatpush.msra.mxu0 0.0
    %158 = vmatpush.msra.mxu0 0.0
    %159 = vmatpush.msra.mxu0 0.0
    %160 = vmatpush.msra.mxu0 0.0
    %161 = vmatpush.msra.mxu0 0.0
    %162 = vmatpush.msra.mxu0 0.0
    %163 = vmatpush.msra.mxu0 0.0
    %164 = vmatpush.msra.mxu0 0.0
    %165 = vmatpush.msra.mxu0 0.0
    %166 = vmatpush.msra.mxu0 0.0
    %167 = vmatpush.msra.mxu0 0.0
    %168 = vmatpush.msra.mxu0 0.0
    %169 = vmatpush.msra.mxu0 %v151
    %170 = vmatpush.msra.mxu0 %v132
    %171 = vmatpush.msra.mxu0 %v130
    %172 = vmatmul.f32.gmra.mxu0 %v144
    %v173 = vpop.f32.mrf.mxu0
    %v174 = vadd.f32 %v138, %v173
    %175 = vmatmul.f32.gmra.mxu0 %v147
    %v176 = vpop.f32.mrf.mxu0
    %v177 = vadd.f32 %v138, %v176
    %178 = vdwg.mxu0
    %179 = vmatpush.msra.mxu0 0.0
    %180 = vmatpush.msra.mxu0 0.0
    %181 = vmatpush.msra.mxu0 0.0
    %182 = vmatpush.msra.mxu0 0.0
    %183 = vmatpush.msra.mxu0 0.0
    %184 = vmatpush.msra.mxu0 0.0
    %185 = vmatpush.msra.mxu0 0.0
    %186 = vmatpush.msra.mxu0 0.0
    %187 = vmatpush.msra.mxu0 0.0
    %188 = vmatpush.msra.mxu0 0.0
    %189 = vmatpush.msra.mxu0 0.0
    %190 = vmatpush.msra.mxu0 0.0
    %191 = vmatpush.msra.mxu0 0.0
    %192 = vmatpush.msra.mxu0 %v154
    %193 = vmatpush.msra.mxu0 %v133
    %194 = vmatpush.msra.mxu0 %v131
    %195 = vmatmul.f32.gmra.mxu0 %v144
    %v196 = vpop.f32.mrf.mxu0
    %v197 = vadd.f32 %v139, %v196
    %198 = vmatmul.f32.gmra.mxu0 %v147
    %v199 = vpop.f32.mrf.mxu0
    %v200 = vadd.f32 %v139, %v199
    %201 = vdwg.mxu0
    %v204 = vrot.slane %v197, 6
    %vm205 = vcmask 1041408
    %v206 = vsel %vm205, %v174, %v204
    %208 = vst [vmem:[#allocation2] sm:$0xf] %v206
    %209 = vst.sshfl [vmem:[#allocation1] sm:$0xff pattern:$0x73625140] %v174
    %210 = vst.sshfl [vmem:[#allocation1 + $0x8] sm:$0xff pattern:$0x73625140] %v197
    %s211 = scalar_lea.vmem [#allocation1], 1
    %v212 = vld [vmem:[%s211] ss:$4 sm:$0xff]
    %s214 = scalar_lea.vmem [#allocation2], 4
    %215 = vst [vmem:[%s214] sm:$0xf] %v212
    %216 = vst.sshfl [vmem:[#allocation1] sm:$0xff pattern:$0x73625140] %v174
    %217 = vst.sshfl [vmem:[#allocation1 + $0x8] sm:$0xff pattern:$0x73625140] %v197
    %s218 = scalar_lea.vmem [#allocation1], 2
    %v219 = vld [vmem:[%s218] ss:$4 sm:$0xff]
    %s221 = scalar_lea.vmem [#allocation2], 8
    %222 = vst [vmem:[%s221] sm:$0xf] %v219
    %223 = vst.sshfl [vmem:[#allocation1] sm:$0xff pattern:$0x73625140] %v174
    %224 = vst.sshfl [vmem:[#allocation1 + $0x8] sm:$0xff pattern:$0x73625140] %v197
    %s225 = scalar_lea.vmem [#allocation1], 3
    %v226 = vld [vmem:[%s225] ss:$4 sm:$0xff]
    %s228 = scalar_lea.vmem [#allocation2], 12
    %229 = vst [vmem:[%s228] sm:$0xf] %v226
    %v232 = vrot.slane %v200, 6
    %v233 = vsel %vm205, %v177, %v232
    %s235 = scalar_lea.vmem [#allocation2], 16
    %236 = vst [vmem:[%s235] sm:$0xf] %v233
    %237 = vst.sshfl [vmem:[#allocation1] sm:$0xff pattern:$0x73625140] %v177
    %238 = vst.sshfl [vmem:[#allocation1 + $0x8] sm:$0xff pattern:$0x73625140] %v200
    %s239 = scalar_lea.vmem [#allocation1], 1
    %v240 = vld [vmem:[%s239] ss:$4 sm:$0xff]
    %s242 = scalar_lea.vmem [#allocation2], 20
    %243 = vst [vmem:[%s242] sm:$0xf] %v240
    %244 = vst.sshfl [vmem:[#allocation1] sm:$0xff pattern:$0x73625140] %v177
    %245 = vst.sshfl [vmem:[#allocation1 + $0x8] sm:$0xff pattern:$0x73625140] %v200
    %s246 = scalar_lea.vmem [#allocation1], 2
    %v247 = vld [vmem:[%s246] ss:$4 sm:$0xff]
    %s249 = scalar_lea.vmem [#allocation2], 24
    %250 = vst [vmem:[%s249] sm:$0xf] %v247
    %251 = vst.sshfl [vmem:[#allocation1] sm:$0xff pattern:$0x73625140] %v177
    %252 = vst.sshfl [vmem:[#allocation1 + $0x8] sm:$0xff pattern:$0x73625140] %v200
    %s253 = scalar_lea.vmem [#allocation1], 3
    %v254 = vld [vmem:[%s253] ss:$4 sm:$0xff]
    %s256 = scalar_lea.vmem [#allocation2], 28
    %257 = vst [vmem:[%s256] sm:$0xf] %v254
    %v258 = vld [vmem:[%s6] sm:$0x3]
    %v260 = vperm.slane %v258, 0
    %v261 = vperm.slane %v258, 1
    %v264 = vld [vmem:[#allocation2] sm:$0xf]
    %vm265 = vcmask 523264
    %v267 = vsel %vm265, 0.0, 0
    %269 = vmatpush.msra.mxu0 0.0
    %270 = vmatpush.msra.mxu0 0.0
    %271 = vmatpush.msra.mxu0 0.0
    %272 = vmatpush.msra.mxu0 0.0
    %273 = vmatpush.msra.mxu0 0.0
    %274 = vmatpush.msra.mxu0 0.0
    %275 = vmatpush.msra.mxu0 0.0
    %276 = vmatpush.msra.mxu0 0.0
    %277 = vmatpush.msra.mxu0 %v94
    %278 = vmatpush.msra.mxu0 %v92
    %279 = vmatpush.msra.mxu0 %v90
    %280 = vmatpush.msra.mxu0 %v88
    %281 = vmatpush.msra.mxu0 %v86
    %282 = vmatpush.msra.mxu0 %v84
    %283 = vmatpush.msra.mxu0 %v82
    %284 = vmatpush.msra.mxu0 %v80
    %285 = vmatmul.f32.gmra.mxu0 %v267
    %v286 = vpop.f32.mrf.mxu0
    %v287 = vadd.f32 0.0, %v286
    %288 = vdwg.mxu0
    %289 = vmatpush.msra.mxu0 0.0
    %290 = vmatpush.msra.mxu0 0.0
    %291 = vmatpush.msra.mxu0 0.0
    %292 = vmatpush.msra.mxu0 0.0
    %293 = vmatpush.msra.mxu0 0.0
    %294 = vmatpush.msra.mxu0 0.0
    %295 = vmatpush.msra.mxu0 0.0
    %296 = vmatpush.msra.mxu0 0.0
    %297 = vmatpush.msra.mxu0 %v95
    %298 = vmatpush.msra.mxu0 %v93
    %299 = vmatpush.msra.mxu0 %v91
    %300 = vmatpush.msra.mxu0 %v89
    %301 = vmatpush.msra.mxu0 %v87
    %302 = vmatpush.msra.mxu0 %v85
    %303 = vmatpush.msra.mxu0 %v83
    %304 = vmatpush.msra.mxu0 %v81
    %305 = vmatmul.f32.gmra.mxu0 %v267
    %v306 = vpop.f32.mrf.mxu0
    %v307 = vadd.f32 0.0, %v306
    %308 = vdwg.mxu0
    %v311 = vrot.slane %v307, 6
    %v312 = vsel %vm205, %v287, %v311
    %v314 = vadd.f32 %v264, %v312
    %v315 = vmul.f32 %v314, 0.5
    %v316 = vtanh.pop %v315
    %v317 = vmul.f32 %v316, 0.5
    %v318 = vadd.f32 %v317, 0.5
    %320 = vrot.lane.b32.xlu0 %v314, 64
    %v321 = vpop.permute.xlu0 %320
    %v322 = vrot.slane %v321, 2
    %v324 = vtanh.pop %v322
    %v325 = vmul.f32 %v318, 0.0
    %v326 = vmul.f32 %v318, %v324
    %328 = vrot.lane.b32.xlu0 %v326, 64
    %v329 = vpop.permute.xlu0 %328
    %v331 = vadd.f32 %v325, %v329
    %v332 = vtanh.pop %v331
    %v334 = vrot.slane %v318, 2
    %337 = vrot.lane.b32.xlu0 %v332, 64
    %v338 = vpop.permute.xlu0 %337
    %v340 = vmul.f32 %v334, %v338
    %341 = vmatpush.msra.mxu0 0.0
    %342 = vmatpush.msra.mxu0 0.0
    %343 = vmatpush.msra.mxu0 0.0
    %344 = vmatpush.msra.mxu0 0.0
    %345 = vmatpush.msra.mxu0 0.0
    %346 = vmatpush.msra.mxu0 0.0
    %347 = vmatpush.msra.mxu0 0.0
    %348 = vmatpush.msra.mxu0 0.0
    %349 = vmatpush.msra.mxu0 %v126
    %350 = vmatpush.msra.mxu0 %v124
    %351 = vmatpush.msra.mxu0 %v122
    %352 = vmatpush.msra.mxu0 %v120
    %353 = vmatpush.msra.mxu0 %v118
    %354 = vmatpush.msra.mxu0 %v116
    %355 = vmatpush.msra.mxu0 %v114
    %356 = vmatpush.msra.mxu0 %v112
    %357 = vmatmul.f32.gmra.mxu0 %v267
    %v358 = vpop.f32.mrf.mxu0
    %v359 = vadd.f32 0.0, %v358
    %360 = vdwg.mxu0
    %361 = vmatpush.msra.mxu0 0.0
    %362 = vmatpush.msra.mxu0 0.0
    %363 = vmatpush.msra.mxu0 0.0
    %364 = vmatpush.msra.mxu0 0.0
    %365 = vmatpush.msra.mxu0 0.0
    %366 = vmatpush.msra.mxu0 0.0
    %367 = vmatpush.msra.mxu0 0.0
    %368 = vmatpush.msra.mxu0 0.0
    %369 = vmatpush.msra.mxu0 %v127
    %370 = vmatpush.msra.mxu0 %v125
    %371 = vmatpush.msra.mxu0 %v123
    %372 = vmatpush.msra.mxu0 %v121
    %373 = vmatpush.msra.mxu0 %v119
    %374 = vmatpush.msra.mxu0 %v117
    %375 = vmatpush.msra.mxu0 %v115
    %376 = vmatpush.msra.mxu0 %v113
    %377 = vmatmul.f32.gmra.mxu0 %v267
    %v378 = vpop.f32.mrf.mxu0
    %v379 = vadd.f32 0.0, %v378
    %380 = vdwg.mxu0
    %v382 = vsel %vm265, %v340, 0
    %384 = vmatpush.msra.mxu0 0.0
    %385 = vmatpush.msra.mxu0 0.0
    %386 = vmatpush.msra.mxu0 0.0
    %387 = vmatpush.msra.mxu0 0.0
    %388 = vmatpush.msra.mxu0 0.0
    %389 = vmatpush.msra.mxu0 0.0
    %390 = vmatpush.msra.mxu0 0.0
    %391 = vmatpush.msra.mxu0 0.0
    %392 = vmatpush.msra.mxu0 %v110
    %393 = vmatpush.msra.mxu0 %v108
    %394 = vmatpush.msra.mxu0 %v106
    %395 = vmatpush.msra.mxu0 %v104
    %396 = vmatpush.msra.mxu0 %v102
    %397 = vmatpush.msra.mxu0 %v100
    %398 = vmatpush.msra.mxu0 %v98
    %399 = vmatpush.msra.mxu0 %v96
    %400 = vmatmul.f32.gmra.mxu0 %v382
    %v401 = vpop.f32.mrf.mxu0
    %v402 = vadd.f32 %v359, %v401
    %403 = vdwg.mxu0
    %404 = vmatpush.msra.mxu0 0.0
    %405 = vmatpush.msra.mxu0 0.0
    %406 = vmatpush.msra.mxu0 0.0
    %407 = vmatpush.msra.mxu0 0.0
    %408 = vmatpush.msra.mxu0 0.0
    %409 = vmatpush.msra.mxu0 0.0
    %410 = vmatpush.msra.mxu0 0.0
    %411 = vmatpush.msra.mxu0 0.0
    %412 = vmatpush.msra.mxu0 %v111
    %413 = vmatpush.msra.mxu0 %v109
    %414 = vmatpush.msra.mxu0 %v107
    %415 = vmatpush.msra.mxu0 %v105
    %416 = vmatpush.msra.mxu0 %v103
    %417 = vmatpush.msra.mxu0 %v101
    %418 = vmatpush.msra.mxu0 %v99
    %419 = vmatpush.msra.mxu0 %v97
    %420 = vmatmul.f32.gmra.mxu0 %v382
    %v421 = vpop.f32.mrf.mxu0
    %v422 = vadd.f32 %v379, %v421
    %423 = vdwg.mxu0
    %v424 = vadd.f32 %v402, %v260
    %v425 = vadd.f32 %v422, %v261
    %v426 = vmul.f32 %v424, 0.5
    %v427 = vmul.f32 %v425, 0.5
    %v428 = vtanh.pop %v426
    %v429 = vtanh.pop %v427
    %v430 = vmul.f32 %v428, 0.5
    %v431 = vmul.f32 %v429, 0.5
    %v432 = vadd.f32 %v430, 0.5
    %v433 = vadd.f32 %v431, 0.5
    %v434 = vtanh.pop %v425
    %v435 = vmul.f32 %v432, 0.0
    %437 = vrot.lane.b32.xlu0 %v434, 64
    %v438 = vpop.permute.xlu0 %437
    %v440 = vmul.f32 %v432, %v438
    %442 = vrot.lane.b32.xlu0 %v440, 64
    %v443 = vpop.permute.xlu0 %442
    %v445 = vadd.f32 %v435, %v443
    %v446 = vtanh.pop %v445
    %448 = vrot.lane.b32.xlu0 %v446, 64
    %v449 = vpop.permute.xlu0 %448
    %v451 = vmul.f32 %v433, %v449
    %v452 = vld [vmem:[%s214] sm:$0xf]
    %453 = vmatpush.msra.mxu0 0.0
    %454 = vmatpush.msra.mxu0 0.0
    %455 = vmatpush.msra.mxu0 0.0
    %456 = vmatpush.msra.mxu0 0.0
    %457 = vmatpush.msra.mxu0 0.0
    %458 = vmatpush.msra.mxu0 0.0
    %459 = vmatpush.msra.mxu0 0.0
    %460 = vmatpush.msra.mxu0 0.0
    %461 = vmatpush.msra.mxu0 %v94
    %462 = vmatpush.msra.mxu0 %v92
    %463 = vmatpush.msra.mxu0 %v90
    %464 = vmatpush.msra.mxu0 %v88
    %465 = vmatpush.msra.mxu0 %v86
    %466 = vmatpush.msra.mxu0 %v84
    %467 = vmatpush.msra.mxu0 %v82
    %468 = vmatpush.msra.mxu0 %v80
    %469 = vmatmul.f32.gmra.mxu0 %v382
    %v470 = vpop.f32.mrf.mxu0
    %v471 = vadd.f32 0.0, %v470
    %472 = vdwg.mxu0
    %473 = vmatpush.msra.mxu0 0.0
    %474 = vmatpush.msra.mxu0 0.0
    %475 = vmatpush.msra.mxu0 0.0
    %476 = vmatpush.msra.mxu0 0.0
    %477 = vmatpush.msra.mxu0 0.0
    %478 = vmatpush.msra.mxu0 0.0
    %479 = vmatpush.msra.mxu0 0.0
    %480 = vmatpush.msra.mxu0 0.0
    %481 = vmatpush.msra.mxu0 %v95
    %482 = vmatpush.msra.mxu0 %v93
    %483 = vmatpush.msra.mxu0 %v91
    %484 = vmatpush.msra.mxu0 %v89
    %485 = vmatpush.msra.mxu0 %v87
    %486 = vmatpush.msra.mxu0 %v85
    %487 = vmatpush.msra.mxu0 %v83
    %488 = vmatpush.msra.mxu0 %v81
    %489 = vmatmul.f32.gmra.mxu0 %v382
    %v490 = vpop.f32.mrf.mxu0
    %v491 = vadd.f32 0.0, %v490
    %492 = vdwg.mxu0
    %v495 = vrot.slane %v491, 6
    %v496 = vsel %vm205, %v471, %v495
    %v498 = vadd.f32 %v452, %v496
    %v499 = vmul.f32 %v498, 0.5
    %v500 = vtanh.pop %v499
    %v501 = vmul.f32 %v500, 0.5
    %v502 = vadd.f32 %v501, 0.5
    %504 = vrot.lane.b32.xlu0 %v498, 64
    %v505 = vpop.permute.xlu0 %504
    %v506 = vrot.slane %v505, 2
    %v508 = vtanh.pop %v506
    %v509 = vmul.f32 %v502, %v331
    %v510 = vmul.f32 %v502, %v508
    %512 = vrot.lane.b32.xlu0 %v510, 64
    %v513 = vpop.permute.xlu0 %512
    %v515 = vadd.f32 %v509, %v513
    %v516 = vtanh.pop %v515
    %v518 = vrot.slane %v502, 2
    %521 = vrot.lane.b32.xlu0 %v516, 64
    %v522 = vpop.permute.xlu0 %521
    %v524 = vmul.f32 %v518, %v522
    %v526 = vsel %vm265, %v451, 0
    %528 = vmatpush.msra.mxu0 0.0
    %529 = vmatpush.msra.mxu0 0.0
    %530 = vmatpush.msra.mxu0 0.0
    %531 = vmatpush.msra.mxu0 0.0
    %532 = vmatpush.msra.mxu0 0.0
    %533 = vmatpush.msra.mxu0 0.0
    %534 = vmatpush.msra.mxu0 0.0
    %535 = vmatpush.msra.mxu0 0.0
    %536 = vmatpush.msra.mxu0 %v126
    %537 = vmatpush.msra.mxu0 %v124
    %538 = vmatpush.msra.mxu0 %v122
    %539 = vmatpush.msra.mxu0 %v120
    %540 = vmatpush.msra.mxu0 %v118
    %541 = vmatpush.msra.mxu0 %v116
    %542 = vmatpush.msra.mxu0 %v114
    %543 = vmatpush.msra.mxu0 %v112
    %544 = vmatmul.f32.gmra.mxu0 %v526
    %v545 = vpop.f32.mrf.mxu0
    %v546 = vadd.f32 0.0, %v545
    %547 = vdwg.mxu0
    %548 = vmatpush.msra.mxu0 0.0
    %549 = vmatpush.msra.mxu0 0.0
    %550 = vmatpush.msra.mxu0 0.0
    %551 = vmatpush.msra.mxu0 0.0
    %552 = vmatpush.msra.mxu0 0.0
    %553 = vmatpush.msra.mxu0 0.0
    %554 = vmatpush.msra.mxu0 0.0
    %555 = vmatpush.msra.mxu0 0.0
    %556 = vmatpush.msra.mxu0 %v127
    %557 = vmatpush.msra.mxu0 %v125
    %558 = vmatpush.msra.mxu0 %v123
    %559 = vmatpush.msra.mxu0 %v121
    %560 = vmatpush.msra.mxu0 %v119
    %561 = vmatpush.msra.mxu0 %v117
    %562 = vmatpush.msra.mxu0 %v115
    %563 = vmatpush.msra.mxu0 %v113
    %564 = vmatmul.f32.gmra.mxu0 %v526
    %v565 = vpop.f32.mrf.mxu0
    %v566 = vadd.f32 0.0, %v565
    %567 = vdwg.mxu0
    %v569 = vsel %vm265, %v524, 0
    %571 = vmatpush.msra.mxu0 0.0
    %572 = vmatpush.msra.mxu0 0.0
    %573 = vmatpush.msra.mxu0 0.0
    %574 = vmatpush.msra.mxu0 0.0
    %575 = vmatpush.msra.mxu0 0.0
    %576 = vmatpush.msra.mxu0 0.0
    %577 = vmatpush.msra.mxu0 0.0
    %578 = vmatpush.msra.mxu0 0.0
    %579 = vmatpush.msra.mxu0 %v110
    %580 = vmatpush.msra.mxu0 %v108
    %581 = vmatpush.msra.mxu0 %v106
    %582 = vmatpush.msra.mxu0 %v104
    %583 = vmatpush.msra.mxu0 %v102
    %584 = vmatpush.msra.mxu0 %v100
    %585 = vmatpush.msra.mxu0 %v98
    %586 = vmatpush.msra.mxu0 %v96
    %587 = vmatmul.f32.gmra.mxu0 %v569
    %v588 = vpop.f32.mrf.mxu0
    %v589 = vadd.f32 %v546, %v588
    %590 = vdwg.mxu0
    %591 = vmatpush.msra.mxu0 0.0
    %592 = vmatpush.msra.mxu0 0.0
    %593 = vmatpush.msra.mxu0 0.0
    %594 = vmatpush.msra.mxu0 0.0
    %595 = vmatpush.msra.mxu0 0.0
    %596 = vmatpush.msra.mxu0 0.0
    %597 = vmatpush.msra.mxu0 0.0
    %598 = vmatpush.msra.mxu0 0.0
    %599 = vmatpush.msra.mxu0 %v111
    %600 = vmatpush.msra.mxu0 %v109
    %601 = vmatpush.msra.mxu0 %v107
    %602 = vmatpush.msra.mxu0 %v105
    %603 = vmatpush.msra.mxu0 %v103
    %604 = vmatpush.msra.mxu0 %v101
    %605 = vmatpush.msra.mxu0 %v99
    %606 = vmatpush.msra.mxu0 %v97
    %607 = vmatmul.f32.gmra.mxu0 %v569
    %v608 = vpop.f32.mrf.mxu0
    %v609 = vadd.f32 %v566, %v608
    %610 = vdwg.mxu0
    %v611 = vadd.f32 %v589, %v260
    %v612 = vadd.f32 %v609, %v261
    %v613 = vmul.f32 %v611, 0.5
    %v614 = vmul.f32 %v612, 0.5
    %v615 = vtanh.pop %v613
    %v616 = vtanh.pop %v614
    %v617 = vmul.f32 %v615, 0.5
    %v618 = vmul.f32 %v616, 0.5
    %v619 = vadd.f32 %v617, 0.5
    %v620 = vadd.f32 %v618, 0.5
    %v621 = vtanh.pop %v612
    %v622 = vmul.f32 %v619, %v445
    %624 = vrot.lane.b32.xlu0 %v621, 64
    %v625 = vpop.permute.xlu0 %624
    %v627 = vmul.f32 %v619, %v625
    %629 = vrot.lane.b32.xlu0 %v627, 64
    %v630 = vpop.permute.xlu0 %629
    %v632 = vadd.f32 %v622, %v630
    %v633 = vtanh.pop %v632
    %635 = vrot.lane.b32.xlu0 %v633, 64
    %v636 = vpop.permute.xlu0 %635
    %v638 = vmul.f32 %v620, %v636
    %v639 = vld [vmem:[%s221] sm:$0xf]
    %640 = vmatpush.msra.mxu0 0.0
    %641 = vmatpush.msra.mxu0 0.0
    %642 = vmatpush.msra.mxu0 0.0
    %643 = vmatpush.msra.mxu0 0.0
    %644 = vmatpush.msra.mxu0 0.0
    %645 = vmatpush.msra.mxu0 0.0
    %646 = vmatpush.msra.mxu0 0.0
    %647 = vmatpush.msra.mxu0 0.0
    %648 = vmatpush.msra.mxu0 %v94
    %649 = vmatpush.msra.mxu0 %v92
    %650 = vmatpush.msra.mxu0 %v90
    %651 = vmatpush.msra.mxu0 %v88
    %652 = vmatpush.msra.mxu0 %v86
    %653 = vmatpush.msra.mxu0 %v84
    %654 = vmatpush.msra.mxu0 %v82
    %655 = vmatpush.msra.mxu0 %v80
    %656 = vmatmul.f32.gmra.mxu0 %v569
    %v657 = vpop.f32.mrf.mxu0
    %v658 = vadd.f32 0.0, %v657
    %659 = vdwg.mxu0
    %660 = vmatpush.msra.mxu0 0.0
    %661 = vmatpush.msra.mxu0 0.0
    %662 = vmatpush.msra.mxu0 0.0
    %663 = vmatpush.msra.mxu0 0.0
    %664 = vmatpush.msra.mxu0 0.0
    %665 = vmatpush.msra.mxu0 0.0
    %666 = vmatpush.msra.mxu0 0.0
    %667 = vmatpush.msra.mxu0 0.0
    %668 = vmatpush.msra.mxu0 %v95
    %669 = vmatpush.msra.mxu0 %v93
    %670 = vmatpush.msra.mxu0 %v91
    %671 = vmatpush.msra.mxu0 %v89
    %672 = vmatpush.msra.mxu0 %v87
    %673 = vmatpush.msra.mxu0 %v85
    %674 = vmatpush.msra.mxu0 %v83
    %675 = vmatpush.msra.mxu0 %v81
    %676 = vmatmul.f32.gmra.mxu0 %v569
    %v677 = vpop.f32.mrf.mxu0
    %v678 = vadd.f32 0.0, %v677
    %679 = vdwg.mxu0
    %v682 = vrot.slane %v678, 6
    %v683 = vsel %vm205, %v658, %v682
    %v685 = vadd.f32 %v639, %v683
    %v686 = vmul.f32 %v685, 0.5
    %v687 = vtanh.pop %v686
    %v688 = vmul.f32 %v687, 0.5
    %v689 = vadd.f32 %v688, 0.5
    %691 = vrot.lane.b32.xlu0 %v685, 64
    %v692 = vpop.permute.xlu0 %691
    %v693 = vrot.slane %v692, 2
    %v695 = vtanh.pop %v693
    %v696 = vmul.f32 %v689, %v515
    %v697 = vmul.f32 %v689, %v695
    %699 = vrot.lane.b32.xlu0 %v697, 64
    %v700 = vpop.permute.xlu0 %699
    %v702 = vadd.f32 %v696, %v700
    %v703 = vtanh.pop %v702
    %v705 = vrot.slane %v689, 2
    %708 = vrot.lane.b32.xlu0 %v703, 64
    %v709 = vpop.permute.xlu0 %708
    %v711 = vmul.f32 %v705, %v709
    %v713 = vsel %vm265, %v638, 0
    %715 = vmatpush.msra.mxu0 0.0
    %716 = vmatpush.msra.mxu0 0.0
    %717 = vmatpush.msra.mxu0 0.0
    %718 = vmatpush.msra.mxu0 0.0
    %719 = vmatpush.msra.mxu0 0.0
    %720 = vmatpush.msra.mxu0 0.0
    %721 = vmatpush.msra.mxu0 0.0
    %722 = vmatpush.msra.mxu0 0.0
    %723 = vmatpush.msra.mxu0 %v126
    %724 = vmatpush.msra.mxu0 %v124
    %725 = vmatpush.msra.mxu0 %v122
    %726 = vmatpush.msra.mxu0 %v120
    %727 = vmatpush.msra.mxu0 %v118
    %728 = vmatpush.msra.mxu0 %v116
    %729 = vmatpush.msra.mxu0 %v114
    %730 = vmatpush.msra.mxu0 %v112
    %731 = vmatmul.f32.gmra.mxu0 %v713
    %v732 = vpop.f32.mrf.mxu0
    %v733 = vadd.f32 0.0, %v732
    %734 = vdwg.mxu0
    %735 = vmatpush.msra.mxu0 0.0
    %736 = vmatpush.msra.mxu0 0.0
    %737 = vmatpush.msra.mxu0 0.0
    %738 = vmatpush.msra.mxu0 0.0
    %739 = vmatpush.msra.mxu0 0.0
    %740 = vmatpush.msra.mxu0 0.0
    %741 = vmatpush.msra.mxu0 0.0
    %742 = vmatpush.msra.mxu0 0.0
    %743 = vmatpush.msra.mxu0 %v127
    %744 = vmatpush.msra.mxu0 %v125
    %745 = vmatpush.msra.mxu0 %v123
    %746 = vmatpush.msra.mxu0 %v121
    %747 = vmatpush.msra.mxu0 %v119
    %748 = vmatpush.msra.mxu0 %v117
    %749 = vmatpush.msra.mxu0 %v115
    %750 = vmatpush.msra.mxu0 %v113
    %751 = vmatmul.f32.gmra.mxu0 %v713
    %v752 = vpop.f32.mrf.mxu0
    %v753 = vadd.f32 0.0, %v752
    %754 = vdwg.mxu0
    %v756 = vsel %vm265, %v711, 0
    %758 = vmatpush.msra.mxu0 0.0
    %759 = vmatpush.msra.mxu0 0.0
    %760 = vmatpush.msra.mxu0 0.0
    %761 = vmatpush.msra.mxu0 0.0
    %762 = vmatpush.msra.mxu0 0.0
    %763 = vmatpush.msra.mxu0 0.0
    %764 = vmatpush.msra.mxu0 0.0
    %765 = vmatpush.msra.mxu0 0.0
    %766 = vmatpush.msra.mxu0 %v110
    %767 = vmatpush.msra.mxu0 %v108
    %768 = vmatpush.msra.mxu0 %v106
    %769 = vmatpush.msra.mxu0 %v104
    %770 = vmatpush.msra.mxu0 %v102
    %771 = vmatpush.msra.mxu0 %v100
    %772 = vmatpush.msra.mxu0 %v98
    %773 = vmatpush.msra.mxu0 %v96
    %774 = vmatmul.f32.gmra.mxu0 %v756
    %v775 = vpop.f32.mrf.mxu0
    %v776 = vadd.f32 %v733, %v775
    %777 = vdwg.mxu0
    %778 = vmatpush.msra.mxu0 0.0
    %779 = vmatpush.msra.mxu0 0.0
    %780 = vmatpush.msra.mxu0 0.0
    %781 = vmatpush.msra.mxu0 0.0
    %782 = vmatpush.msra.mxu0 0.0
    %783 = vmatpush.msra.mxu0 0.0
    %784 = vmatpush.msra.mxu0 0.0
    %785 = vmatpush.msra.mxu0 0.0
    %786 = vmatpush.msra.mxu0 %v111
    %787 = vmatpush.msra.mxu0 %v109
    %788 = vmatpush.msra.mxu0 %v107
    %789 = vmatpush.msra.mxu0 %v105
    %790 = vmatpush.msra.mxu0 %v103
    %791 = vmatpush.msra.mxu0 %v101
    %792 = vmatpush.msra.mxu0 %v99
    %793 = vmatpush.msra.mxu0 %v97
    %794 = vmatmul.f32.gmra.mxu0 %v756
    %v795 = vpop.f32.mrf.mxu0
    %v796 = vadd.f32 %v753, %v795
    %797 = vdwg.mxu0
    %v798 = vadd.f32 %v776, %v260
    %v799 = vadd.f32 %v796, %v261
    %v800 = vmul.f32 %v798, 0.5
    %v801 = vmul.f32 %v799, 0.5
    %v802 = vtanh.pop %v800
    %v803 = vtanh.pop %v801
    %v804 = vmul.f32 %v802, 0.5
    %v805 = vmul.f32 %v803, 0.5
    %v806 = vadd.f32 %v804, 0.5
    %v807 = vadd.f32 %v805, 0.5
    %v808 = vtanh.pop %v799
    %v809 = vmul.f32 %v806, %v632
    %811 = vrot.lane.b32.xlu0 %v808, 64
    %v812 = vpop.permute.xlu0 %811
    %v814 = vmul.f32 %v806, %v812
    %816 = vrot.lane.b32.xlu0 %v814, 64
    %v817 = vpop.permute.xlu0 %816
    %v819 = vadd.f32 %v809, %v817
    %v820 = vtanh.pop %v819
    %822 = vrot.lane.b32.xlu0 %v820, 64
    %v823 = vpop.permute.xlu0 %822
    %v825 = vmul.f32 %v807, %v823
    %v826 = vld [vmem:[%s228] sm:$0xf]
    %827 = vmatpush.msra.mxu0 0.0
    %828 = vmatpush.msra.mxu0 0.0
    %829 = vmatpush.msra.mxu0 0.0
    %830 = vmatpush.msra.mxu0 0.0
    %831 = vmatpush.msra.mxu0 0.0
    %832 = vmatpush.msra.mxu0 0.0
    %833 = vmatpush.msra.mxu0 0.0
    %834 = vmatpush.msra.mxu0 0.0
    %835 = vmatpush.msra.mxu0 %v94
    %836 = vmatpush.msra.mxu0 %v92
    %837 = vmatpush.msra.mxu0 %v90
    %838 = vmatpush.msra.mxu0 %v88
    %839 = vmatpush.msra.mxu0 %v86
    %840 = vmatpush.msra.mxu0 %v84
    %841 = vmatpush.msra.mxu0 %v82
    %842 = vmatpush.msra.mxu0 %v80
    %843 = vmatmul.f32.gmra.mxu0 %v756
    %v844 = vpop.f32.mrf.mxu0
    %v845 = vadd.f32 0.0, %v844
    %846 = vdwg.mxu0
    %847 = vmatpush.msra.mxu0 0.0
    %848 = vmatpush.msra.mxu0 0.0
    %849 = vmatpush.msra.mxu0 0.0
    %850 = vmatpush.msra.mxu0 0.0
    %851 = vmatpush.msra.mxu0 0.0
    %852 = vmatpush.msra.mxu0 0.0
    %853 = vmatpush.msra.mxu0 0.0
    %854 = vmatpush.msra.mxu0 0.0
    %855 = vmatpush.msra.mxu0 %v95
    %856 = vmatpush.msra.mxu0 %v93
    %857 = vmatpush.msra.mxu0 %v91
    %858 = vmatpush.msra.mxu0 %v89
    %859 = vmatpush.msra.mxu0 %v87
    %860 = vmatpush.msra.mxu0 %v85
    %861 = vmatpush.msra.mxu0 %v83
    %862 = vmatpush.msra.mxu0 %v81
    %863 = vmatmul.f32.gmra.mxu0 %v756
    %v864 = vpop.f32.mrf.mxu0
    %v865 = vadd.f32 0.0, %v864
    %866 = vdwg.mxu0
    %v869 = vrot.slane %v865, 6
    %v870 = vsel %vm205, %v845, %v869
    %v872 = vadd.f32 %v826, %v870
    %v873 = vmul.f32 %v872, 0.5
    %v874 = vtanh.pop %v873
    %v875 = vmul.f32 %v874, 0.5
    %v876 = vadd.f32 %v875, 0.5
    %878 = vrot.lane.b32.xlu0 %v872, 64
    %v879 = vpop.permute.xlu0 %878
    %v880 = vrot.slane %v879, 2
    %v882 = vtanh.pop %v880
    %v883 = vmul.f32 %v876, %v702
    %v884 = vmul.f32 %v876, %v882
    %886 = vrot.lane.b32.xlu0 %v884, 64
    %v887 = vpop.permute.xlu0 %886
    %v889 = vadd.f32 %v883, %v887
    %v890 = vtanh.pop %v889
    %v892 = vrot.slane %v876, 2
    %895 = vrot.lane.b32.xlu0 %v890, 64
    %v896 = vpop.permute.xlu0 %895
    %v898 = vmul.f32 %v892, %v896
    %v900 = vsel %vm265, %v825, 0
    %902 = vmatpush.msra.mxu0 0.0
    %903 = vmatpush.msra.mxu0 0.0
    %904 = vmatpush.msra.mxu0 0.0
    %905 = vmatpush.msra.mxu0 0.0
    %906 = vmatpush.msra.mxu0 0.0
    %907 = vmatpush.msra.mxu0 0.0
    %908 = vmatpush.msra.mxu0 0.0
    %909 = vmatpush.msra.mxu0 0.0
    %910 = vmatpush.msra.mxu0 %v126
    %911 = vmatpush.msra.mxu0 %v124
    %912 = vmatpush.msra.mxu0 %v122
    %913 = vmatpush.msra.mxu0 %v120
    %914 = vmatpush.msra.mxu0 %v118
    %915 = vmatpush.msra.mxu0 %v116
    %916 = vmatpush.msra.mxu0 %v114
    %917 = vmatpush.msra.mxu0 %v112
    %918 = vmatmul.f32.gmra.mxu0 %v900
    %v919 = vpop.f32.mrf.mxu0
    %v920 = vadd.f32 0.0, %v919
    %921 = vdwg.mxu0
    %922 = vmatpush.msra.mxu0 0.0
    %923 = vmatpush.msra.mxu0 0.0
    %924 = vmatpush.msra.mxu0 0.0
    %925 = vmatpush.msra.mxu0 0.0
    %926 = vmatpush.msra.mxu0 0.0
    %927 = vmatpush.msra.mxu0 0.0
    %928 = vmatpush.msra.mxu0 0.0
    %929 = vmatpush.msra.mxu0 0.0
    %930 = vmatpush.msra.mxu0 %v127
    %931 = vmatpush.msra.mxu0 %v125
    %932 = vmatpush.msra.mxu0 %v123
    %933 = vmatpush.msra.mxu0 %v121
    %934 = vmatpush.msra.mxu0 %v119
    %935 = vmatpush.msra.mxu0 %v117
    %936 = vmatpush.msra.mxu0 %v115
    %937 = vmatpush.msra.mxu0 %v113
    %938 = vmatmul.f32.gmra.mxu0 %v900
    %v939 = vpop.f32.mrf.mxu0
    %v940 = vadd.f32 0.0, %v939
    %941 = vdwg.mxu0
    %v943 = vsel %vm265, %v898, 0
    %945 = vmatpush.msra.mxu0 0.0
    %946 = vmatpush.msra.mxu0 0.0
    %947 = vmatpush.msra.mxu0 0.0
    %948 = vmatpush.msra.mxu0 0.0
    %949 = vmatpush.msra.mxu0 0.0
    %950 = vmatpush.msra.mxu0 0.0
    %951 = vmatpush.msra.mxu0 0.0
    %952 = vmatpush.msra.mxu0 0.0
    %953 = vmatpush.msra.mxu0 %v110
    %954 = vmatpush.msra.mxu0 %v108
    %955 = vmatpush.msra.mxu0 %v106
    %956 = vmatpush.msra.mxu0 %v104
    %957 = vmatpush.msra.mxu0 %v102
    %958 = vmatpush.msra.mxu0 %v100
    %959 = vmatpush.msra.mxu0 %v98
    %960 = vmatpush.msra.mxu0 %v96
    %961 = vmatmul.f32.gmra.mxu0 %v943
    %v962 = vpop.f32.mrf.mxu0
    %v963 = vadd.f32 %v920, %v962
    %964 = vdwg.mxu0
    %965 = vmatpush.msra.mxu0 0.0
    %966 = vmatpush.msra.mxu0 0.0
    %967 = vmatpush.msra.mxu0 0.0
    %968 = vmatpush.msra.mxu0 0.0
    %969 = vmatpush.msra.mxu0 0.0
    %970 = vmatpush.msra.mxu0 0.0
    %971 = vmatpush.msra.mxu0 0.0
    %972 = vmatpush.msra.mxu0 0.0
    %973 = vmatpush.msra.mxu0 %v111
    %974 = vmatpush.msra.mxu0 %v109
    %975 = vmatpush.msra.mxu0 %v107
    %976 = vmatpush.msra.mxu0 %v105
    %977 = vmatpush.msra.mxu0 %v103
    %978 = vmatpush.msra.mxu0 %v101
    %979 = vmatpush.msra.mxu0 %v99
    %980 = vmatpush.msra.mxu0 %v97
    %981 = vmatmul.f32.gmra.mxu0 %v943
    %v982 = vpop.f32.mrf.mxu0
    %v983 = vadd.f32 %v940, %v982
    %984 = vdwg.mxu0
    %v985 = vadd.f32 %v963, %v260
    %v986 = vadd.f32 %v983, %v261
    %v987 = vmul.f32 %v985, 0.5
    %v988 = vmul.f32 %v986, 0.5
    %v989 = vtanh.pop %v987
    %v990 = vtanh.pop %v988
    %v991 = vmul.f32 %v989, 0.5
    %v992 = vmul.f32 %v990, 0.5
    %v993 = vadd.f32 %v991, 0.5
    %v994 = vadd.f32 %v992, 0.5
    %v995 = vtanh.pop %v986
    %v996 = vmul.f32 %v993, %v819
    %998 = vrot.lane.b32.xlu0 %v995, 64
    %v999 = vpop.permute.xlu0 %998
    %v1001 = vmul.f32 %v993, %v999
    %1003 = vrot.lane.b32.xlu0 %v1001, 64
    %v1004 = vpop.permute.xlu0 %1003
    %v1006 = vadd.f32 %v996, %v1004
    %v1007 = vtanh.pop %v1006
    %1009 = vrot.lane.b32.xlu0 %v1007, 64
    %v1010 = vpop.permute.xlu0 %1009
    %v1012 = vmul.f32 %v994, %v1010
    %v1013 = vld [vmem:[%s235] sm:$0xf]
    %1014 = vmatpush.msra.mxu0 0.0
    %1015 = vmatpush.msra.mxu0 0.0
    %1016 = vmatpush.msra.mxu0 0.0
    %1017 = vmatpush.msra.mxu0 0.0
    %1018 = vmatpush.msra.mxu0 0.0
    %1019 = vmatpush.msra.mxu0 0.0
    %1020 = vmatpush.msra.mxu0 0.0
    %1021 = vmatpush.msra.mxu0 0.0
    %1022 = vmatpush.msra.mxu0 %v94
    %1023 = vmatpush.msra.mxu0 %v92
    %1024 = vmatpush.msra.mxu0 %v90
    %1025 = vmatpush.msra.mxu0 %v88
    %1026 = vmatpush.msra.mxu0 %v86
    %1027 = vmatpush.msra.mxu0 %v84
    %1028 = vmatpush.msra.mxu0 %v82
    %1029 = vmatpush.msra.mxu0 %v80
    %1030 = vmatmul.f32.gmra.mxu0 %v943
    %v1031 = vpop.f32.mrf.mxu0
    %v1032 = vadd.f32 0.0, %v1031
    %1033 = vdwg.mxu0
    %1034 = vmatpush.msra.mxu0 0.0
    %1035 = vmatpush.msra.mxu0 0.0
    %1036 = vmatpush.msra.mxu0 0.0
    %1037 = vmatpush.msra.mxu0 0.0
    %1038 = vmatpush.msra.mxu0 0.0
    %1039 = vmatpush.msra.mxu0 0.0
    %1040 = vmatpush.msra.mxu0 0.0
    %1041 = vmatpush.msra.mxu0 0.0
    %1042 = vmatpush.msra.mxu0 %v95
    %1043 = vmatpush.msra.mxu0 %v93
    %1044 = vmatpush.msra.mxu0 %v91
    %1045 = vmatpush.msra.mxu0 %v89
    %1046 = vmatpush.msra.mxu0 %v87
    %1047 = vmatpush.msra.mxu0 %v85
    %1048 = vmatpush.msra.mxu0 %v83
    %1049 = vmatpush.msra.mxu0 %v81
    %1050 = vmatmul.f32.gmra.mxu0 %v943
    %v1051 = vpop.f32.mrf.mxu0
    %v1052 = vadd.f32 0.0, %v1051
    %1053 = vdwg.mxu0
    %v1056 = vrot.slane %v1052, 6
    %v1057 = vsel %vm205, %v1032, %v1056
    %v1059 = vadd.f32 %v1013, %v1057
    %v1060 = vmul.f32 %v1059, 0.5
    %v1061 = vtanh.pop %v1060
    %v1062 = vmul.f32 %v1061, 0.5
    %v1063 = vadd.f32 %v1062, 0.5
    %1065 = vrot.lane.b32.xlu0 %v1059, 64
    %v1066 = vpop.permute.xlu0 %1065
    %v1067 = vrot.slane %v1066, 2
    %v1069 = vtanh.pop %v1067
    %v1070 = vmul.f32 %v1063, %v889
    %v1071 = vmul.f32 %v1063, %v1069
    %1073 = vrot.lane.b32.xlu0 %v1071, 64
    %v1074 = vpop.permute.xlu0 %1073
    %v1076 = vadd.f32 %v1070, %v1074
    %v1077 = vtanh.pop %v1076
    %v1079 = vrot.slane %v1063, 2
    %1082 = vrot.lane.b32.xlu0 %v1077, 64
    %v1083 = vpop.permute.xlu0 %1082
    %v1085 = vmul.f32 %v1079, %v1083
    %v1087 = vsel %vm265, %v1012, 0
    %1089 = vmatpush.msra.mxu0 0.0
    %1090 = vmatpush.msra.mxu0 0.0
    %1091 = vmatpush.msra.mxu0 0.0
    %1092 = vmatpush.msra.mxu0 0.0
    %1093 = vmatpush.msra.mxu0 0.0
    %1094 = vmatpush.msra.mxu0 0.0
    %1095 = vmatpush.msra.mxu0 0.0
    %1096 = vmatpush.msra.mxu0 0.0
    %1097 = vmatpush.msra.mxu0 %v126
    %1098 = vmatpush.msra.mxu0 %v124
    %1099 = vmatpush.msra.mxu0 %v122
    %1100 = vmatpush.msra.mxu0 %v120
    %1101 = vmatpush.msra.mxu0 %v118
    %1102 = vmatpush.msra.mxu0 %v116
    %1103 = vmatpush.msra.mxu0 %v114
    %1104 = vmatpush.msra.mxu0 %v112
    %1105 = vmatmul.f32.gmra.mxu0 %v1087
    %v1106 = vpop.f32.mrf.mxu0
    %v1107 = vadd.f32 0.0, %v1106
    %1108 = vdwg.mxu0
    %1109 = vmatpush.msra.mxu0 0.0
    %1110 = vmatpush.msra.mxu0 0.0
    %1111 = vmatpush.msra.mxu0 0.0
    %1112 = vmatpush.msra.mxu0 0.0
    %1113 = vmatpush.msra.mxu0 0.0
    %1114 = vmatpush.msra.mxu0 0.0
    %1115 = vmatpush.msra.mxu0 0.0
    %1116 = vmatpush.msra.mxu0 0.0
    %1117 = vmatpush.msra.mxu0 %v127
    %1118 = vmatpush.msra.mxu0 %v125
    %1119 = vmatpush.msra.mxu0 %v123
    %1120 = vmatpush.msra.mxu0 %v121
    %1121 = vmatpush.msra.mxu0 %v119
    %1122 = vmatpush.msra.mxu0 %v117
    %1123 = vmatpush.msra.mxu0 %v115
    %1124 = vmatpush.msra.mxu0 %v113
    %1125 = vmatmul.f32.gmra.mxu0 %v1087
    %v1126 = vpop.f32.mrf.mxu0
    %v1127 = vadd.f32 0.0, %v1126
    %1128 = vdwg.mxu0
    %v1130 = vsel %vm265, %v1085, 0
    %1132 = vmatpush.msra.mxu0 0.0
    %1133 = vmatpush.msra.mxu0 0.0
    %1134 = vmatpush.msra.mxu0 0.0
    %1135 = vmatpush.msra.mxu0 0.0
    %1136 = vmatpush.msra.mxu0 0.0
    %1137 = vmatpush.msra.mxu0 0.0
    %1138 = vmatpush.msra.mxu0 0.0
    %1139 = vmatpush.msra.mxu0 0.0
    %1140 = vmatpush.msra.mxu0 %v110
    %1141 = vmatpush.msra.mxu0 %v108
    %1142 = vmatpush.msra.mxu0 %v106
    %1143 = vmatpush.msra.mxu0 %v104
    %1144 = vmatpush.msra.mxu0 %v102
    %1145 = vmatpush.msra.mxu0 %v100
    %1146 = vmatpush.msra.mxu0 %v98
    %1147 = vmatpush.msra.mxu0 %v96
    %1148 = vmatmul.f32.gmra.mxu0 %v1130
    %v1149 = vpop.f32.mrf.mxu0
    %v1150 = vadd.f32 %v1107, %v1149
    %1151 = vdwg.mxu0
    %1152 = vmatpush.msra.mxu0 0.0
    %1153 = vmatpush.msra.mxu0 0.0
    %1154 = vmatpush.msra.mxu0 0.0
    %1155 = vmatpush.msra.mxu0 0.0
    %1156 = vmatpush.msra.mxu0 0.0
    %1157 = vmatpush.msra.mxu0 0.0
    %1158 = vmatpush.msra.mxu0 0.0
    %1159 = vmatpush.msra.mxu0 0.0
    %1160 = vmatpush.msra.mxu0 %v111
    %1161 = vmatpush.msra.mxu0 %v109
    %1162 = vmatpush.msra.mxu0 %v107
    %1163 = vmatpush.msra.mxu0 %v105
    %1164 = vmatpush.msra.mxu0 %v103
    %1165 = vmatpush.msra.mxu0 %v101
    %1166 = vmatpush.msra.mxu0 %v99
    %1167 = vmatpush.msra.mxu0 %v97
    %1168 = vmatmul.f32.gmra.mxu0 %v1130
    %v1169 = vpop.f32.mrf.mxu0
    %v1170 = vadd.f32 %v1127, %v1169
    %1171 = vdwg.mxu0
    %v1172 = vadd.f32 %v1150, %v260
    %v1173 = vadd.f32 %v1170, %v261
    %v1174 = vmul.f32 %v1172, 0.5
    %v1175 = vmul.f32 %v1173, 0.5
    %v1176 = vtanh.pop %v1174
    %v1177 = vtanh.pop %v1175
    %v1178 = vmul.f32 %v1176, 0.5
    %v1179 = vmul.f32 %v1177, 0.5
    %v1180 = vadd.f32 %v1178, 0.5
    %v1181 = vadd.f32 %v1179, 0.5
    %v1182 = vtanh.pop %v1173
    %v1183 = vmul.f32 %v1180, %v1006
    %1185 = vrot.lane.b32.xlu0 %v1182, 64
    %v1186 = vpop.permute.xlu0 %1185
    %v1188 = vmul.f32 %v1180, %v1186
    %1190 = vrot.lane.b32.xlu0 %v1188, 64
    %v1191 = vpop.permute.xlu0 %1190
    %v1193 = vadd.f32 %v1183, %v1191
    %v1194 = vtanh.pop %v1193
    %1196 = vrot.lane.b32.xlu0 %v1194, 64
    %v1197 = vpop.permute.xlu0 %1196
    %v1199 = vmul.f32 %v1181, %v1197
    %v1200 = vld [vmem:[%s242] sm:$0xf]
    %1201 = vmatpush.msra.mxu0 0.0
    %1202 = vmatpush.msra.mxu0 0.0
    %1203 = vmatpush.msra.mxu0 0.0
    %1204 = vmatpush.msra.mxu0 0.0
    %1205 = vmatpush.msra.mxu0 0.0
    %1206 = vmatpush.msra.mxu0 0.0
    %1207 = vmatpush.msra.mxu0 0.0
    %1208 = vmatpush.msra.mxu0 0.0
    %1209 = vmatpush.msra.mxu0 %v94
    %1210 = vmatpush.msra.mxu0 %v92
    %1211 = vmatpush.msra.mxu0 %v90
    %1212 = vmatpush.msra.mxu0 %v88
    %1213 = vmatpush.msra.mxu0 %v86
    %1214 = vmatpush.msra.mxu0 %v84
    %1215 = vmatpush.msra.mxu0 %v82
    %1216 = vmatpush.msra.mxu0 %v80
    %1217 = vmatmul.f32.gmra.mxu0 %v1130
    %v1218 = vpop.f32.mrf.mxu0
    %v1219 = vadd.f32 0.0, %v1218
    %1220 = vdwg.mxu0
    %1221 = vmatpush.msra.mxu0 0.0
    %1222 = vmatpush.msra.mxu0 0.0
    %1223 = vmatpush.msra.mxu0 0.0
    %1224 = vmatpush.msra.mxu0 0.0
    %1225 = vmatpush.msra.mxu0 0.0
    %1226 = vmatpush.msra.mxu0 0.0
    %1227 = vmatpush.msra.mxu0 0.0
    %1228 = vmatpush.msra.mxu0 0.0
    %1229 = vmatpush.msra.mxu0 %v95
    %1230 = vmatpush.msra.mxu0 %v93
    %1231 = vmatpush.msra.mxu0 %v91
    %1232 = vmatpush.msra.mxu0 %v89
    %1233 = vmatpush.msra.mxu0 %v87
    %1234 = vmatpush.msra.mxu0 %v85
    %1235 = vmatpush.msra.mxu0 %v83
    %1236 = vmatpush.msra.mxu0 %v81
    %1237 = vmatmul.f32.gmra.mxu0 %v1130
    %v1238 = vpop.f32.mrf.mxu0
    %v1239 = vadd.f32 0.0, %v1238
    %1240 = vdwg.mxu0
    %v1243 = vrot.slane %v1239, 6
    %v1244 = vsel %vm205, %v1219, %v1243
    %v1246 = vadd.f32 %v1200, %v1244
    %v1247 = vmul.f32 %v1246, 0.5
    %v1248 = vtanh.pop %v1247
    %v1249 = vmul.f32 %v1248, 0.5
    %v1250 = vadd.f32 %v1249, 0.5
    %1252 = vrot.lane.b32.xlu0 %v1246, 64
    %v1253 = vpop.permute.xlu0 %1252
    %v1254 = vrot.slane %v1253, 2
    %v1256 = vtanh.pop %v1254
    %v1257 = vmul.f32 %v1250, %v1076
    %v1258 = vmul.f32 %v1250, %v1256
    %1260 = vrot.lane.b32.xlu0 %v1258, 64
    %v1261 = vpop.permute.xlu0 %1260
    %v1263 = vadd.f32 %v1257, %v1261
    %v1264 = vtanh.pop %v1263
    %v1266 = vrot.slane %v1250, 2
    %1269 = vrot.lane.b32.xlu0 %v1264, 64
    %v1270 = vpop.permute.xlu0 %1269
    %v1272 = vmul.f32 %v1266, %v1270
    %v1274 = vsel %vm265, %v1199, 0
    %1276 = vmatpush.msra.mxu0 0.0
    %1277 = vmatpush.msra.mxu0 0.0
    %1278 = vmatpush.msra.mxu0 0.0
    %1279 = vmatpush.msra.mxu0 0.0
    %1280 = vmatpush.msra.mxu0 0.0
    %1281 = vmatpush.msra.mxu0 0.0
    %1282 = vmatpush.msra.mxu0 0.0
    %1283 = vmatpush.msra.mxu0 0.0
    %1284 = vmatpush.msra.mxu0 %v126
    %1285 = vmatpush.msra.mxu0 %v124
    %1286 = vmatpush.msra.mxu0 %v122
    %1287 = vmatpush.msra.mxu0 %v120
    %1288 = vmatpush.msra.mxu0 %v118
    %1289 = vmatpush.msra.mxu0 %v116
    %1290 = vmatpush.msra.mxu0 %v114
    %1291 = vmatpush.msra.mxu0 %v112
    %1292 = vmatmul.f32.gmra.mxu0 %v1274
    %v1293 = vpop.f32.mrf.mxu0
    %v1294 = vadd.f32 0.0, %v1293
    %1295 = vdwg.mxu0
    %1296 = vmatpush.msra.mxu0 0.0
    %1297 = vmatpush.msra.mxu0 0.0
    %1298 = vmatpush.msra.mxu0 0.0
    %1299 = vmatpush.msra.mxu0 0.0
    %1300 = vmatpush.msra.mxu0 0.0
    %1301 = vmatpush.msra.mxu0 0.0
    %1302 = vmatpush.msra.mxu0 0.0
    %1303 = vmatpush.msra.mxu0 0.0
    %1304 = vmatpush.msra.mxu0 %v127
    %1305 = vmatpush.msra.mxu0 %v125
    %1306 = vmatpush.msra.mxu0 %v123
    %1307 = vmatpush.msra.mxu0 %v121
    %1308 = vmatpush.msra.mxu0 %v119
    %1309 = vmatpush.msra.mxu0 %v117
    %1310 = vmatpush.msra.mxu0 %v115
    %1311 = vmatpush.msra.mxu0 %v113
    %1312 = vmatmul.f32.gmra.mxu0 %v1274
    %v1313 = vpop.f32.mrf.mxu0
    %v1314 = vadd.f32 0.0, %v1313
    %1315 = vdwg.mxu0
    %v1317 = vsel %vm265, %v1272, 0
    %1319 = vmatpush.msra.mxu0 0.0
    %1320 = vmatpush.msra.mxu0 0.0
    %1321 = vmatpush.msra.mxu0 0.0
    %1322 = vmatpush.msra.mxu0 0.0
    %1323 = vmatpush.msra.mxu0 0.0
    %1324 = vmatpush.msra.mxu0 0.0
    %1325 = vmatpush.msra.mxu0 0.0
    %1326 = vmatpush.msra.mxu0 0.0
    %1327 = vmatpush.msra.mxu0 %v110
    %1328 = vmatpush.msra.mxu0 %v108
    %1329 = vmatpush.msra.mxu0 %v106
    %1330 = vmatpush.msra.mxu0 %v104
    %1331 = vmatpush.msra.mxu0 %v102
    %1332 = vmatpush.msra.mxu0 %v100
    %1333 = vmatpush.msra.mxu0 %v98
    %1334 = vmatpush.msra.mxu0 %v96
    %1335 = vmatmul.f32.gmra.mxu0 %v1317
    %v1336 = vpop.f32.mrf.mxu0
    %v1337 = vadd.f32 %v1294, %v1336
    %1338 = vdwg.mxu0
    %1339 = vmatpush.msra.mxu0 0.0
    %1340 = vmatpush.msra.mxu0 0.0
    %1341 = vmatpush.msra.mxu0 0.0
    %1342 = vmatpush.msra.mxu0 0.0
    %1343 = vmatpush.msra.mxu0 0.0
    %1344 = vmatpush.msra.mxu0 0.0
    %1345 = vmatpush.msra.mxu0 0.0
    %1346 = vmatpush.msra.mxu0 0.0
    %1347 = vmatpush.msra.mxu0 %v111
    %1348 = vmatpush.msra.mxu0 %v109
    %1349 = vmatpush.msra.mxu0 %v107
    %1350 = vmatpush.msra.mxu0 %v105
    %1351 = vmatpush.msra.mxu0 %v103
    %1352 = vmatpush.msra.mxu0 %v101
    %1353 = vmatpush.msra.mxu0 %v99
    %1354 = vmatpush.msra.mxu0 %v97
    %1355 = vmatmul.f32.gmra.mxu0 %v1317
    %v1356 = vpop.f32.mrf.mxu0
    %v1357 = vadd.f32 %v1314, %v1356
    %1358 = vdwg.mxu0
    %v1359 = vadd.f32 %v1337, %v260
    %v1360 = vadd.f32 %v1357, %v261
    %v1361 = vmul.f32 %v1359, 0.5
    %v1362 = vmul.f32 %v1360, 0.5
    %v1363 = vtanh.pop %v1361
    %v1364 = vtanh.pop %v1362
    %v1365 = vmul.f32 %v1363, 0.5
    %v1366 = vmul.f32 %v1364, 0.5
    %v1367 = vadd.f32 %v1365, 0.5
    %v1368 = vadd.f32 %v1366, 0.5
    %v1369 = vtanh.pop %v1360
    %v1370 = vmul.f32 %v1367, %v1193
    %1372 = vrot.lane.b32.xlu0 %v1369, 64
    %v1373 = vpop.permute.xlu0 %1372
    %v1375 = vmul.f32 %v1367, %v1373
    %1377 = vrot.lane.b32.xlu0 %v1375, 64
    %v1378 = vpop.permute.xlu0 %1377
    %v1380 = vadd.f32 %v1370, %v1378
    %v1381 = vtanh.pop %v1380
    %1383 = vrot.lane.b32.xlu0 %v1381, 64
    %v1384 = vpop.permute.xlu0 %1383
    %v1386 = vmul.f32 %v1368, %v1384
    %v1387 = vld [vmem:[%s249] sm:$0xf]
    %1388 = vmatpush.msra.mxu0 0.0
    %1389 = vmatpush.msra.mxu0 0.0
    %1390 = vmatpush.msra.mxu0 0.0
    %1391 = vmatpush.msra.mxu0 0.0
    %1392 = vmatpush.msra.mxu0 0.0
    %1393 = vmatpush.msra.mxu0 0.0
    %1394 = vmatpush.msra.mxu0 0.0
    %1395 = vmatpush.msra.mxu0 0.0
    %1396 = vmatpush.msra.mxu0 %v94
    %1397 = vmatpush.msra.mxu0 %v92
    %1398 = vmatpush.msra.mxu0 %v90
    %1399 = vmatpush.msra.mxu0 %v88
    %1400 = vmatpush.msra.mxu0 %v86
    %1401 = vmatpush.msra.mxu0 %v84
    %1402 = vmatpush.msra.mxu0 %v82
    %1403 = vmatpush.msra.mxu0 %v80
    %1404 = vmatmul.f32.gmra.mxu0 %v1317
    %v1405 = vpop.f32.mrf.mxu0
    %v1406 = vadd.f32 0.0, %v1405
    %1407 = vdwg.mxu0
    %1408 = vmatpush.msra.mxu0 0.0
    %1409 = vmatpush.msra.mxu0 0.0
    %1410 = vmatpush.msra.mxu0 0.0
    %1411 = vmatpush.msra.mxu0 0.0
    %1412 = vmatpush.msra.mxu0 0.0
    %1413 = vmatpush.msra.mxu0 0.0
    %1414 = vmatpush.msra.mxu0 0.0
    %1415 = vmatpush.msra.mxu0 0.0
    %1416 = vmatpush.msra.mxu0 %v95
    %1417 = vmatpush.msra.mxu0 %v93
    %1418 = vmatpush.msra.mxu0 %v91
    %1419 = vmatpush.msra.mxu0 %v89
    %1420 = vmatpush.msra.mxu0 %v87
    %1421 = vmatpush.msra.mxu0 %v85
    %1422 = vmatpush.msra.mxu0 %v83
    %1423 = vmatpush.msra.mxu0 %v81
    %1424 = vmatmul.f32.gmra.mxu0 %v1317
    %v1425 = vpop.f32.mrf.mxu0
    %v1426 = vadd.f32 0.0, %v1425
    %1427 = vdwg.mxu0
    %v1430 = vrot.slane %v1426, 6
    %v1431 = vsel %vm205, %v1406, %v1430
    %v1433 = vadd.f32 %v1387, %v1431
    %v1434 = vmul.f32 %v1433, 0.5
    %v1435 = vtanh.pop %v1434
    %v1436 = vmul.f32 %v1435, 0.5
    %v1437 = vadd.f32 %v1436, 0.5
    %1439 = vrot.lane.b32.xlu0 %v1433, 64
    %v1440 = vpop.permute.xlu0 %1439
    %v1441 = vrot.slane %v1440, 2
    %v1443 = vtanh.pop %v1441
    %v1444 = vmul.f32 %v1437, %v1263
    %v1445 = vmul.f32 %v1437, %v1443
    %1447 = vrot.lane.b32.xlu0 %v1445, 64
    %v1448 = vpop.permute.xlu0 %1447
    %v1450 = vadd.f32 %v1444, %v1448
    %v1451 = vtanh.pop %v1450
    %v1453 = vrot.slane %v1437, 2
    %1456 = vrot.lane.b32.xlu0 %v1451, 64
    %v1457 = vpop.permute.xlu0 %1456
    %v1459 = vmul.f32 %v1453, %v1457
    %v1461 = vsel %vm265, %v1386, 0
    %1463 = vmatpush.msra.mxu0 0.0
    %1464 = vmatpush.msra.mxu0 0.0
    %1465 = vmatpush.msra.mxu0 0.0
    %1466 = vmatpush.msra.mxu0 0.0
    %1467 = vmatpush.msra.mxu0 0.0
    %1468 = vmatpush.msra.mxu0 0.0
    %1469 = vmatpush.msra.mxu0 0.0
    %1470 = vmatpush.msra.mxu0 0.0
    %1471 = vmatpush.msra.mxu0 %v126
    %1472 = vmatpush.msra.mxu0 %v124
    %1473 = vmatpush.msra.mxu0 %v122
    %1474 = vmatpush.msra.mxu0 %v120
    %1475 = vmatpush.msra.mxu0 %v118
    %1476 = vmatpush.msra.mxu0 %v116
    %1477 = vmatpush.msra.mxu0 %v114
    %1478 = vmatpush.msra.mxu0 %v112
    %1479 = vmatmul.f32.gmra.mxu0 %v1461
    %v1480 = vpop.f32.mrf.mxu0
    %v1481 = vadd.f32 0.0, %v1480
    %1482 = vdwg.mxu0
    %1483 = vmatpush.msra.mxu0 0.0
    %1484 = vmatpush.msra.mxu0 0.0
    %1485 = vmatpush.msra.mxu0 0.0
    %1486 = vmatpush.msra.mxu0 0.0
    %1487 = vmatpush.msra.mxu0 0.0
    %1488 = vmatpush.msra.mxu0 0.0
    %1489 = vmatpush.msra.mxu0 0.0
    %1490 = vmatpush.msra.mxu0 0.0
    %1491 = vmatpush.msra.mxu0 %v127
    %1492 = vmatpush.msra.mxu0 %v125
    %1493 = vmatpush.msra.mxu0 %v123
    %1494 = vmatpush.msra.mxu0 %v121
    %1495 = vmatpush.msra.mxu0 %v119
    %1496 = vmatpush.msra.mxu0 %v117
    %1497 = vmatpush.msra.mxu0 %v115
    %1498 = vmatpush.msra.mxu0 %v113
    %1499 = vmatmul.f32.gmra.mxu0 %v1461
    %v1500 = vpop.f32.mrf.mxu0
    %v1501 = vadd.f32 0.0, %v1500
    %1502 = vdwg.mxu0
    %v1504 = vsel %vm265, %v1459, 0
    %1506 = vmatpush.msra.mxu0 0.0
    %1507 = vmatpush.msra.mxu0 0.0
    %1508 = vmatpush.msra.mxu0 0.0
    %1509 = vmatpush.msra.mxu0 0.0
    %1510 = vmatpush.msra.mxu0 0.0
    %1511 = vmatpush.msra.mxu0 0.0
    %1512 = vmatpush.msra.mxu0 0.0
    %1513 = vmatpush.msra.mxu0 0.0
    %1514 = vmatpush.msra.mxu0 %v110
    %1515 = vmatpush.msra.mxu0 %v108
    %1516 = vmatpush.msra.mxu0 %v106
    %1517 = vmatpush.msra.mxu0 %v104
    %1518 = vmatpush.msra.mxu0 %v102
    %1519 = vmatpush.msra.mxu0 %v100
    %1520 = vmatpush.msra.mxu0 %v98
    %1521 = vmatpush.msra.mxu0 %v96
    %1522 = vmatmul.f32.gmra.mxu0 %v1504
    %v1523 = vpop.f32.mrf.mxu0
    %v1524 = vadd.f32 %v1481, %v1523
    %1525 = vdwg.mxu0
    %1526 = vmatpush.msra.mxu0 0.0
    %1527 = vmatpush.msra.mxu0 0.0
    %1528 = vmatpush.msra.mxu0 0.0
    %1529 = vmatpush.msra.mxu0 0.0
    %1530 = vmatpush.msra.mxu0 0.0
    %1531 = vmatpush.msra.mxu0 0.0
    %1532 = vmatpush.msra.mxu0 0.0
    %1533 = vmatpush.msra.mxu0 0.0
    %1534 = vmatpush.msra.mxu0 %v111
    %1535 = vmatpush.msra.mxu0 %v109
    %1536 = vmatpush.msra.mxu0 %v107
    %1537 = vmatpush.msra.mxu0 %v105
    %1538 = vmatpush.msra.mxu0 %v103
    %1539 = vmatpush.msra.mxu0 %v101
    %1540 = vmatpush.msra.mxu0 %v99
    %1541 = vmatpush.msra.mxu0 %v97
    %1542 = vmatmul.f32.gmra.mxu0 %v1504
    %v1543 = vpop.f32.mrf.mxu0
    %v1544 = vadd.f32 %v1501, %v1543
    %1545 = vdwg.mxu0
    %v1546 = vadd.f32 %v1524, %v260
    %v1547 = vadd.f32 %v1544, %v261
    %v1548 = vmul.f32 %v1546, 0.5
    %v1549 = vmul.f32 %v1547, 0.5
    %v1550 = vtanh.pop %v1548
    %v1551 = vtanh.pop %v1549
    %v1552 = vmul.f32 %v1550, 0.5
    %v1553 = vmul.f32 %v1551, 0.5
    %v1554 = vadd.f32 %v1552, 0.5
    %v1555 = vadd.f32 %v1553, 0.5
    %v1556 = vtanh.pop %v1547
    %v1557 = vmul.f32 %v1554, %v1380
    %1559 = vrot.lane.b32.xlu0 %v1556, 64
    %v1560 = vpop.permute.xlu0 %1559
    %v1562 = vmul.f32 %v1554, %v1560
    %1564 = vrot.lane.b32.xlu0 %v1562, 64
    %v1565 = vpop.permute.xlu0 %1564
    %v1567 = vadd.f32 %v1557, %v1565
    %v1568 = vtanh.pop %v1567
    %1570 = vrot.lane.b32.xlu0 %v1568, 64
    %v1571 = vpop.permute.xlu0 %1570
    %v1573 = vmul.f32 %v1555, %v1571
    %v1574 = vld [vmem:[%s256] sm:$0xf]
    %1575 = vmatpush.msra.mxu0 0.0
    %1576 = vmatpush.msra.mxu0 0.0
    %1577 = vmatpush.msra.mxu0 0.0
    %1578 = vmatpush.msra.mxu0 0.0
    %1579 = vmatpush.msra.mxu0 0.0
    %1580 = vmatpush.msra.mxu0 0.0
    %1581 = vmatpush.msra.mxu0 0.0
    %1582 = vmatpush.msra.mxu0 0.0
    %1583 = vmatpush.msra.mxu0 %v94
    %1584 = vmatpush.msra.mxu0 %v92
    %1585 = vmatpush.msra.mxu0 %v90
    %1586 = vmatpush.msra.mxu0 %v88
    %1587 = vmatpush.msra.mxu0 %v86
    %1588 = vmatpush.msra.mxu0 %v84
    %1589 = vmatpush.msra.mxu0 %v82
    %1590 = vmatpush.msra.mxu0 %v80
    %1591 = vmatmul.f32.gmra.mxu0 %v1504
    %v1592 = vpop.f32.mrf.mxu0
    %v1593 = vadd.f32 0.0, %v1592
    %1594 = vdwg.mxu0
    %1595 = vmatpush.msra.mxu0 0.0
    %1596 = vmatpush.msra.mxu0 0.0
    %1597 = vmatpush.msra.mxu0 0.0
    %1598 = vmatpush.msra.mxu0 0.0
    %1599 = vmatpush.msra.mxu0 0.0
    %1600 = vmatpush.msra.mxu0 0.0
    %1601 = vmatpush.msra.mxu0 0.0
    %1602 = vmatpush.msra.mxu0 0.0
    %1603 = vmatpush.msra.mxu0 %v95
    %1604 = vmatpush.msra.mxu0 %v93
    %1605 = vmatpush.msra.mxu0 %v91
    %1606 = vmatpush.msra.mxu0 %v89
    %1607 = vmatpush.msra.mxu0 %v87
    %1608 = vmatpush.msra.mxu0 %v85
    %1609 = vmatpush.msra.mxu0 %v83
    %1610 = vmatpush.msra.mxu0 %v81
    %1611 = vmatmul.f32.gmra.mxu0 %v1504
    %v1612 = vpop.f32.mrf.mxu0
    %v1613 = vadd.f32 0.0, %v1612
    %1614 = vdwg.mxu0
    %v1617 = vrot.slane %v1613, 6
    %v1618 = vsel %vm205, %v1593, %v1617
    %v1620 = vadd.f32 %v1574, %v1618
    %v1621 = vmul.f32 %v1620, 0.5
    %v1622 = vtanh.pop %v1621
    %v1623 = vmul.f32 %v1622, 0.5
    %v1624 = vadd.f32 %v1623, 0.5
    %1626 = vrot.lane.b32.xlu0 %v1620, 64
    %v1627 = vpop.permute.xlu0 %1626
    %v1628 = vrot.slane %v1627, 2
    %v1630 = vtanh.pop %v1628
    %v1631 = vmul.f32 %v1624, %v1450
    %v1632 = vmul.f32 %v1624, %v1630
    %1634 = vrot.lane.b32.xlu0 %v1632, 64
    %v1635 = vpop.permute.xlu0 %1634
    %v1637 = vadd.f32 %v1631, %v1635
    %v1638 = vtanh.pop %v1637
    %v1640 = vrot.slane %v1624, 2
    %1643 = vrot.lane.b32.xlu0 %v1638, 64
    %v1644 = vpop.permute.xlu0 %1643
    %v1646 = vmul.f32 %v1640, %v1644
    %v1648 = vsel %vm265, %v1573, 0
    %1650 = vmatpush.msra.mxu0 0.0
    %1651 = vmatpush.msra.mxu0 0.0
    %1652 = vmatpush.msra.mxu0 0.0
    %1653 = vmatpush.msra.mxu0 0.0
    %1654 = vmatpush.msra.mxu0 0.0
    %1655 = vmatpush.msra.mxu0 0.0
    %1656 = vmatpush.msra.mxu0 0.0
    %1657 = vmatpush.msra.mxu0 0.0
    %1658 = vmatpush.msra.mxu0 %v126
    %1659 = vmatpush.msra.mxu0 %v124
    %1660 = vmatpush.msra.mxu0 %v122
    %1661 = vmatpush.msra.mxu0 %v120
    %1662 = vmatpush.msra.mxu0 %v118
    %1663 = vmatpush.msra.mxu0 %v116
    %1664 = vmatpush.msra.mxu0 %v114
    %1665 = vmatpush.msra.mxu0 %v112
    %1666 = vmatmul.f32.gmra.mxu0 %v1648
    %v1667 = vpop.f32.mrf.mxu0
    %v1668 = vadd.f32 0.0, %v1667
    %1669 = vdwg.mxu0
    %1670 = vmatpush.msra.mxu0 0.0
    %1671 = vmatpush.msra.mxu0 0.0
    %1672 = vmatpush.msra.mxu0 0.0
    %1673 = vmatpush.msra.mxu0 0.0
    %1674 = vmatpush.msra.mxu0 0.0
    %1675 = vmatpush.msra.mxu0 0.0
    %1676 = vmatpush.msra.mxu0 0.0
    %1677 = vmatpush.msra.mxu0 0.0
    %1678 = vmatpush.msra.mxu0 %v127
    %1679 = vmatpush.msra.mxu0 %v125
    %1680 = vmatpush.msra.mxu0 %v123
    %1681 = vmatpush.msra.mxu0 %v121
    %1682 = vmatpush.msra.mxu0 %v119
    %1683 = vmatpush.msra.mxu0 %v117
    %1684 = vmatpush.msra.mxu0 %v115
    %1685 = vmatpush.msra.mxu0 %v113
    %1686 = vmatmul.f32.gmra.mxu0 %v1648
    %v1687 = vpop.f32.mrf.mxu0
    %v1688 = vadd.f32 0.0, %v1687
    %1689 = vdwg.mxu0
    %v1691 = vsel %vm265, %v1646, 0
    %1693 = vmatpush.msra.mxu0 0.0
    %1694 = vmatpush.msra.mxu0 0.0
    %1695 = vmatpush.msra.mxu0 0.0
    %1696 = vmatpush.msra.mxu0 0.0
    %1697 = vmatpush.msra.mxu0 0.0
    %1698 = vmatpush.msra.mxu0 0.0
    %1699 = vmatpush.msra.mxu0 0.0
    %1700 = vmatpush.msra.mxu0 0.0
    %1701 = vmatpush.msra.mxu0 %v110
    %1702 = vmatpush.msra.mxu0 %v108
    %1703 = vmatpush.msra.mxu0 %v106
    %1704 = vmatpush.msra.mxu0 %v104
    %1705 = vmatpush.msra.mxu0 %v102
    %1706 = vmatpush.msra.mxu0 %v100
    %1707 = vmatpush.msra.mxu0 %v98
    %1708 = vmatpush.msra.mxu0 %v96
    %1709 = vmatmul.f32.gmra.mxu0 %v1691
    %v1710 = vpop.f32.mrf.mxu0
    %v1711 = vadd.f32 %v1668, %v1710
    %1712 = vdwg.mxu0
    %1713 = vmatpush.msra.mxu0 0.0
    %1714 = vmatpush.msra.mxu0 0.0
    %1715 = vmatpush.msra.mxu0 0.0
    %1716 = vmatpush.msra.mxu0 0.0
    %1717 = vmatpush.msra.mxu0 0.0
    %1718 = vmatpush.msra.mxu0 0.0
    %1719 = vmatpush.msra.mxu0 0.0
    %1720 = vmatpush.msra.mxu0 0.0
    %1721 = vmatpush.msra.mxu0 %v111
    %1722 = vmatpush.msra.mxu0 %v109
    %1723 = vmatpush.msra.mxu0 %v107
    %1724 = vmatpush.msra.mxu0 %v105
    %1725 = vmatpush.msra.mxu0 %v103
    %1726 = vmatpush.msra.mxu0 %v101
    %1727 = vmatpush.msra.mxu0 %v99
    %1728 = vmatpush.msra.mxu0 %v97
    %1729 = vmatmul.f32.gmra.mxu0 %v1691
    %v1730 = vpop.f32.mrf.mxu0
    %v1731 = vadd.f32 %v1688, %v1730
    %1732 = vdwg.mxu0
    %v1733 = vadd.f32 %v1711, %v260
    %v1734 = vadd.f32 %v1731, %v261
    %v1735 = vmul.f32 %v1733, 0.5
    %v1736 = vmul.f32 %v1734, 0.5
    %v1737 = vtanh.pop %v1735
    %v1738 = vtanh.pop %v1736
    %v1739 = vmul.f32 %v1737, 0.5
    %v1740 = vmul.f32 %v1738, 0.5
    %v1741 = vadd.f32 %v1739, 0.5
    %v1742 = vadd.f32 %v1740, 0.5
    %v1743 = vtanh.pop %v1734
    %v1744 = vmul.f32 %v1741, %v1567
    %1746 = vrot.lane.b32.xlu0 %v1743, 64
    %v1747 = vpop.permute.xlu0 %1746
    %v1749 = vmul.f32 %v1741, %v1747
    %1751 = vrot.lane.b32.xlu0 %v1749, 64
    %v1752 = vpop.permute.xlu0 %1751
    %v1754 = vadd.f32 %v1744, %v1752
    %v1755 = vtanh.pop %v1754
    %1757 = vrot.lane.b32.xlu0 %v1755, 64
    %v1758 = vpop.permute.xlu0 %1757
    %v1760 = vmul.f32 %v1742, %v1758
    %v1761 = vld [vmem:[%s7] sm:$0xff]
    %v1762 = vld [vmem:[%s7 + $0x8] sm:$0xff]
    %v1763 = vld [vmem:[%s7 + $0x10] sm:$0xff]
    %v1764 = vld [vmem:[%s7 + $0x18] sm:$0xff]
    %v1765 = vld [vmem:[%s7 + $0x20] sm:$0xff]
    %v1766 = vld [vmem:[%s7 + $0x28] sm:$0xff]
    %v1767 = vld [vmem:[%s7 + $0x30] sm:$0xff]
    %v1768 = vld [vmem:[%s7 + $0x38] sm:$0xff]
    %v1769 = vld [vmem:[%s8] sm:$0x1]
    %v1771 = vperm.slane %v1769, 0
    %v1774 = vsel %vm265, %v1760, 0
    %1776 = vmatpush.msra.mxu0 0.0
    %1777 = vmatpush.msra.mxu0 0.0
    %1778 = vmatpush.msra.mxu0 0.0
    %1779 = vmatpush.msra.mxu0 0.0
    %1780 = vmatpush.msra.mxu0 0.0
    %1781 = vmatpush.msra.mxu0 0.0
    %1782 = vmatpush.msra.mxu0 0.0
    %1783 = vmatpush.msra.mxu0 0.0
    %1784 = vmatpush.msra.mxu0 %v1768
    %1785 = vmatpush.msra.mxu0 %v1767
    %1786 = vmatpush.msra.mxu0 %v1766
    %1787 = vmatpush.msra.mxu0 %v1765
    %1788 = vmatpush.msra.mxu0 %v1764
    %1789 = vmatpush.msra.mxu0 %v1763
    %1790 = vmatpush.msra.mxu0 %v1762
    %1791 = vmatpush.msra.mxu0 %v1761
    %1792 = vmatmul.f32.gmra.mxu0 %v1774
    %v1793 = vpop.f32.mrf.mxu0
    %v1794 = vadd.f32 %v1771, %v1793
    %1795 = vdwg.mxu0
    %vm1796 = vcmask 33792
    %1797 = vst.msk [vmem:[#allocation9] sm:$0x3] %vm1796, %v1794
    // Predicated region
    $region50: #{tpu_custom_call.1} parent=1 // pred_check
      _
    $region51: #{tpu_custom_call.1} parent=1 // pred_check_branch
      %1799 = sbr.rel (0) target = $region53
    $region52: #{tpu_custom_call.1} parent=1 // pred_region
      %1801 = vsyncadd [#allocation5], 0
      %s1803 = sshll.u32 [#allocation9], 4
      %s1804 = int_to_ptr.vmem [resolvable:$true] %s1803
      %s1805 = sshll.u32 %s9, 4
      %s1806 = int_to_ptr.hbm [resolvable:$true] %s1805
      %1808 = dma.vmem_to_hbm [thread:$0]  %s1804, 32, %s1806, [#allocation5]
    $region53: #{tpu_custom_call.1} parent=1 // pred_fallthru
      _
    // Predicated region
    $region54: #{tpu_custom_call.1} parent=1 // pred_check
      _
    $region55: #{tpu_custom_call.1} parent=1 // pred_check_branch
      %1810 = sbr.rel (0) target = $region57
    $region56: #{tpu_custom_call.1} parent=1 // pred_region
      %1812 = dma.done [#allocation5], 32
    $region57: #{tpu_custom_call.1} parent=1 // pred_fallthru
      _
    %1813 = vsyncpa [#allocation4], 1
    %1814 = vsyncpa [#allocation7], 1
    %1815 = vsyncpa [#allocation5], 1

</llo_original>
